<compile_context>
chip_gen: v5e
topology: v5e:2x2
jax: 0.10.0
libtpu: 0.0.40
codegen_flags: <defaults>
</compile_context>

<pallas_src>
import numpy as np
import jax
import jax.numpy as jnp
from jax.experimental import pallas as pl
from jax.experimental.pallas import tpu as pltpu

EPS = 1e-5  # nn.InstanceNorm2d default eps (affine=False, biased variance)


# ---------------------------------------------------------------------------
# Fused forward pass
# ---------------------------------------------------------------------------
def resnet_block_forward(x, w1, b1, w2, b2):
    """out = x + conv_block(x); x is NCHW float32."""
    B, C, H, W = x.shape
    assert H >= 2 and W >= 2, "ReflectionPad2d(1) requires H, W >= 2"
    Hp, Wp = H + 2, W + 2
    SPAD = Hp * Wp                        # reflection-padded image, flattened
    SB = ((SPAD + 127) // 128) * 128      # per-sample lane block
    L = B * SB                            # total lanes (multiple of 128)
    CP = ((C + 7) // 8) * 8               # channels padded to 8-sublane tiles
    inv_n = 1.0 / float(H * W)

    # ---- host-side prep (cheap layout plumbing; no O(L^2) tensors) ---------
    xp = jnp.pad(x, ((0, 0), (0, 0), (1, 1), (1, 1)), mode="reflect")
    xp = jnp.transpose(xp, (1, 0, 2, 3)).reshape(C, B, SPAD)
    xp = jnp.pad(xp, ((0, CP - C), (0, 0), (0, SB - SPAD)))
    xpf = xp.reshape(CP, L)                                     # (CP, L)

    def fold_taps(w):   # (C, C, 3, 3) -> (CP, 9*CP); column = (kh*3+kw)*CP+ci
        wt = jnp.transpose(w, (0, 2, 3, 1))                     # (co,kh,kw,ci)
        wt = jnp.pad(wt, ((0, CP - C), (0, 0), (0, 0), (0, CP - C)))
        return wt.reshape(CP, 9 * CP)

    wf1, wf2 = fold_taps(w1), fold_taps(w2)
    b1c = jnp.pad(b1, (0, CP - C)).reshape(CP, 1)
    b2c = jnp.pad(b2, (0, CP - C)).reshape(CP, 1)

    # static lane bookkeeping (NumPy -> trace-time constants)
    lane = np.arange(L)
    q = lane % SB                         # offset inside the per-sample block
    bidx = lane // SB                     # which sample owns this lane
    prow, pcol = q // Wp, q % Wp
    in_img = q < SPAD                     # lanes holding padded-image data
    valid = (q < H * Wp) & (pcol < W)     # lanes holding valid conv outputs

    # stage-2 ReflectionPad2d(1) selection masks (3 column + 3 row branches)
    padmask = np.stack([
        (pcol == 0) & in_img,
        (pcol >= 1) & (pcol <= W) & in_img,
        (pcol == W + 1) & in_img,
        (prow == 0) & in_img,
        (prow >= 1) & (prow <= H) & in_img,
        (prow == H + 1) & in_img,
    ]).astype(np.float32)                                       # (6, L)

    # per-sample valid-lane masks for InstanceNorm statistics
    vmask = np.zeros((B, L), np.float32)
    vmask[bidx[valid], lane[valid]] = 1.0                        # (B, L)

    padmask = jnp.asarray(padmask)
    vmask = jnp.asarray(vmask)

    # conv tap shifts (tap t = kh*3 + kw), pad branch shifts, residual shift,
    # all expressed as non-negative lane-roll amounts (roll == jnp.roll).
    tap_shift = [(-(kh * Wp + kw)) % L for kh in range(3) for kw in range(3)]
    col_shift = [(-1) % L, 1, 3]          # pcol==0 / 1..W / ==W+1
    row_shift = [(-Wp) % L, Wp, 3 * Wp]   # prow==0 / 1..H / ==H+1
    res_shift = (-(Wp + 1)) % L           # original x = centre of padded block

    # ---- the fused kernel ---------------------------------------------------
    def kernel(xpf_ref, w1_ref, b1_ref, w2_ref, b2_ref,
               pm_ref, vm_ref, o_ref, xk_ref):

        def lroll(v, shift):                        # lane rotation on the XLU
            return pltpu.roll(v, shift, axis=1) if shift else v

        def conv3x3(src, w_ref, b_ref):
            # Stage the 9 tap-shifted copies along sublanes (each tap block is
            # CP rows = whole 8-sublane tiles -> aligned full stores), then
            # contract taps+channels in ONE K=9*CP matmul on the MXU.
            for t, s in enumerate(tap_shift):
                xk_ref[pl.ds(t * CP, CP), :] = lroll(src, s)
            y = jnp.dot(w_ref[...], xk_ref[...],
                        preferred_element_type=jnp.float32)
            return y + b_ref[...]

        def instance_norm(y):
            # Per-(sample, channel) stats over each sample's H*W valid lanes.
            # Batch lives on lanes, so one masked reduction per sample (B is
            # tiny here; the production grid tiles over batch, see TODO).
            mean_l = jnp.zeros_like(y)
            for b in range(B):
                m = vm_ref[b:b + 1, :]                               # (1, L)
                mean_l = mean_l + m * (
                    jnp.sum(y * m, axis=1, keepdims=True) * inv_n)
            cen = y - mean_l
            var_l = jnp.zeros_like(y)
            for b in range(B):
                m = vm_ref[b:b + 1, :]
                var_l = var_l + m * (
                    jnp.sum(cen * cen * m, axis=1, keepdims=True) * inv_n)
            return cen * jax.lax.rsqrt(var_l + EPS)   # exact rsqrt (EUP slot)

        x_v = xpf_ref[...]                                       # (CP, L)

        # stage 1: conv -> IN -> ReLU
        h = jnp.maximum(instance_norm(conv3x3(x_v, w1_ref, b1_ref)), 0.0)

        # in-kernel ReflectionPad2d(1) of h: 6 lane-rolls + mask FMAs
        cpad = (pm_ref[0:1, :] * lroll(h, col_shift[0])
                + pm_ref[1:2, :] * lroll(h, col_shift[1])
                + pm_ref[2:3, :] * lroll(h, col_shift[2]))
        hpad = (pm_ref[3:4, :] * lroll(cpad, row_shift[0])
                + pm_ref[4:5, :] * lroll(cpad, row_shift[1])
                + pm_ref[5:6, :] * lroll(cpad, row_shift[2]))

        # stage 2: conv -> IN, then residual add
        y2 = instance_norm(conv3x3(hpad, w2_ref, b2_ref))
        o_ref[...] = lroll(x_v, res_shift) + y2

    out_flat = pl.pallas_call(
        kernel,
        out_shape=jax.ShapeDtypeStruct((CP, L), jnp.float32),
        grid=(1,),
        in_specs=[
            pl.BlockSpec((CP, L), lambda i: (0, 0)),        # padded x
            pl.BlockSpec((CP, 9 * CP), lambda i: (0, 0)),   # w1 folded taps
            pl.BlockSpec((CP, 1), lambda i: (0, 0)),        # b1
            pl.BlockSpec((CP, 9 * CP), lambda i: (0, 0)),   # w2 folded taps
            pl.BlockSpec((CP, 1), lambda i: (0, 0)),        # b2
            pl.BlockSpec((6, L), lambda i: (0, 0)),         # pad-select masks
            pl.BlockSpec((B, L), lambda i: (0, 0)),         # IN valid masks
        ],
        out_specs=pl.BlockSpec((CP, L), lambda i: (0, 0)),
        scratch_shapes=[pltpu.VMEM((9 * CP, L), jnp.float32)],  # tap staging
        compiler_params=pltpu.CompilerParams(
            dimension_semantics=("arbitrary",)),
    )(xpf, wf1, b1c, wf2, b2c, padmask, vmask)

    # crop padded channels, wrap columns and the alignment tail; restore NCHW
    out = out_flat[:C].reshape(C, B, SB)[:, :, :H * Wp]
    out = out.reshape(C, B, H, Wp)[:, :, :, :W]
    return jnp.transpose(out, (1, 0, 2, 3))


# ---------------------------------------------------------------------------
# Pure-JAX reference (for correctness check)
# ---------------------------------------------------------------------------
def _ref_forward(x, w1, b1, w2, b2):
    def conv(z, w, b):
        zp = jnp.pad(z, ((0, 0), (0, 0), (1, 1), (1, 1)), mode="reflect")
        y = jax.lax.conv_general_dilated(
            zp, w, (1, 1), "VALID",
            dimension_numbers=("NCHW", "OIHW", "NCHW"))
        return y + b[None, :, None, None]

    def inorm(y):
        mu = jnp.mean(y, axis=(2, 3), keepdims=True)
        v = jnp.mean((y - mu) ** 2, axis=(2, 3), keepdims=True)
        return (y - mu) / jnp.sqrt(v + EPS)

    h = jnp.maximum(inorm(conv(x, w1, b1)), 0.0)
    return x + inorm(conv(h, w2, b2))


# ---------------------------------------------------------------------------
if __name__ == "__main__":
    B, dim, H, W = 2, 4, 16, 16

    key = jax.random.PRNGKey(0)
    kx, kw1, kb1, kw2, kb2 = jax.random.split(key, 5)

    fan_in = dim * 3 * 3
    k = 1.0 / float(np.sqrt(fan_in))
    x = jax.random.normal(kx, (B, dim, H, W), dtype=jnp.float32)
    w1 = jax.random.uniform(kw1, (dim, dim, 3, 3), jnp.float32, -k, k)
    b1 = jax.random.uniform(kb1, (dim,), jnp.float32, -k, k)
    w2 = jax.random.uniform(kw2, (dim, dim, 3, 3), jnp.float32, -k, k)
    b2 = jax.random.uniform(kb2, (dim,), jnp.float32, -k, k)

    out = jax.jit(resnet_block_forward)(x, w1, b1, w2, b2)
    out = jax.block_until_ready(out)

    ref = _ref_forward(x, w1, b1, w2, b2)
    assert out.shape == (B, dim, H, W)
    err = float(jnp.max(jnp.abs(out - ref)))
    assert jnp.allclose(out, ref, atol=1e-4, rtol=1e-4), f"max abs err = {err}"

    print("KERNEL_OK")
</pallas_src>

<mosaic_0001>
module attributes {stable_mosaic.version = 11 : i64} {
  func.func @kernel(%arg0: i32, %arg1: memref<8x768xf32, #tpu.memory_space<vmem>>, %arg2: memref<8x72xf32, #tpu.memory_space<vmem>>, %arg3: memref<8x1xf32, #tpu.memory_space<vmem>>, %arg4: memref<8x72xf32, #tpu.memory_space<vmem>>, %arg5: memref<8x1xf32, #tpu.memory_space<vmem>>, %arg6: memref<6x768xf32, #tpu.memory_space<vmem>>, %arg7: memref<2x768xf32, #tpu.memory_space<vmem>>, %arg8: memref<8x768xf32, #tpu.memory_space<vmem>>, %arg9: memref<72x768xf32, #tpu.memory_space<vmem>>) attributes {dimension_semantics = [#tpu.dimension_semantics<arbitrary>], iteration_bounds = array<i64: 1>, scalar_prefetch = 0 : i64, scratch_operands = 1 : i64, tpu.core_type = #tpu.core_type<tc>, window_params = [{pipeline_mode = #tpu.pipeline_mode<synchronous>, transform_indices = @transform_0, window_bounds = array<i64: 8, 768>}, {pipeline_mode = #tpu.pipeline_mode<synchronous>, transform_indices = @transform_1, window_bounds = array<i64: 8, 72>}, {pipeline_mode = #tpu.pipeline_mode<synchronous>, transform_indices = @transform_2, window_bounds = array<i64: 8, 1>}, {pipeline_mode = #tpu.pipeline_mode<synchronous>, transform_indices = @transform_3, window_bounds = array<i64: 8, 72>}, {pipeline_mode = #tpu.pipeline_mode<synchronous>, transform_indices = @transform_4, window_bounds = array<i64: 8, 1>}, {pipeline_mode = #tpu.pipeline_mode<synchronous>, transform_indices = @transform_5, window_bounds = array<i64: 6, 768>}, {pipeline_mode = #tpu.pipeline_mode<synchronous>, transform_indices = @transform_6, window_bounds = array<i64: 2, 768>}, {pipeline_mode = #tpu.pipeline_mode<synchronous>, transform_indices = @transform_7, window_bounds = array<i64: 8, 768>}]} {
    %c0 = arith.constant 0 : index
    %c0_0 = arith.constant 0 : index
    %0 = vector.load %arg1[%c0, %c0_0] : memref<8x768xf32, #tpu.memory_space<vmem>>, vector<8x768xf32>
    %c0_1 = arith.constant 0 : index
    %c0_2 = arith.constant 0 : index
    %1 = vector.load %arg9[%c0_1, %c0_2] : memref<72x768xf32, #tpu.memory_space<vmem>>, vector<8x768xf32>
    tpu.vector_store %arg9[%c0_1, %c0_2], %0 {strides = array<i32>} : memref<72x768xf32, #tpu.memory_space<vmem>>, vector<8x768xf32>,
    %c767_i32 = arith.constant 767 : i32
    %2 = tpu.dynamic_rotate %0 by %c767_i32 dim 1 : vector<8x768xf32>, i32 -> vector<8x768xf32>
    %c8 = arith.constant 8 : index
    %c0_3 = arith.constant 0 : index
    %3 = vector.load %arg9[%c8, %c0_3] : memref<72x768xf32, #tpu.memory_space<vmem>>, vector<8x768xf32>
    tpu.vector_store %arg9[%c8, %c0_3], %2 {strides = array<i32>} : memref<72x768xf32, #tpu.memory_space<vmem>>, vector<8x768xf32>,
    %c766_i32 = arith.constant 766 : i32
    %4 = tpu.dynamic_rotate %0 by %c766_i32 dim 1 : vector<8x768xf32>, i32 -> vector<8x768xf32>
    %c16 = arith.constant 16 : index
    %c0_4 = arith.constant 0 : index
    %5 = vector.load %arg9[%c16, %c0_4] : memref<72x768xf32, #tpu.memory_space<vmem>>, vector<8x768xf32>
    tpu.vector_store %arg9[%c16, %c0_4], %4 {strides = array<i32>} : memref<72x768xf32, #tpu.memory_space<vmem>>, vector<8x768xf32>,
    %c750_i32 = arith.constant 750 : i32
    %6 = tpu.dynamic_rotate %0 by %c750_i32 dim 1 : vector<8x768xf32>, i32 -> vector<8x768xf32>
    %c24 = arith.constant 24 : index
    %c0_5 = arith.constant 0 : index
    %7 = vector.load %arg9[%c24, %c0_5] : memref<72x768xf32, #tpu.memory_space<vmem>>, vector<8x768xf32>
    tpu.vector_store %arg9[%c24, %c0_5], %6 {strides = array<i32>} : memref<72x768xf32, #tpu.memory_space<vmem>>, vector<8x768xf32>,
    %c749_i32 = arith.constant 749 : i32
    %8 = tpu.dynamic_rotate %0 by %c749_i32 dim 1 : vector<8x768xf32>, i32 -> vector<8x768xf32>
    %c32 = arith.constant 32 : index
    %c0_6 = arith.constant 0 : index
    %9 = vector.load %arg9[%c32, %c0_6] : memref<72x768xf32, #tpu.memory_space<vmem>>, vector<8x768xf32>
    tpu.vector_store %arg9[%c32, %c0_6], %8 {strides = array<i32>} : memref<72x768xf32, #tpu.memory_space<vmem>>, vector<8x768xf32>,
    %c748_i32 = arith.constant 748 : i32
    %10 = tpu.dynamic_rotate %0 by %c748_i32 dim 1 : vector<8x768xf32>, i32 -> vector<8x768xf32>
    %c40 = arith.constant 40 : index
    %c0_7 = arith.constant 0 : index
    %11 = vector.load %arg9[%c40, %c0_7] : memref<72x768xf32, #tpu.memory_space<vmem>>, vector<8x768xf32>
    tpu.vector_store %arg9[%c40, %c0_7], %10 {strides = array<i32>} : memref<72x768xf32, #tpu.memory_space<vmem>>, vector<8x768xf32>,
    %c732_i32 = arith.constant 732 : i32
    %12 = tpu.dynamic_rotate %0 by %c732_i32 dim 1 : vector<8x768xf32>, i32 -> vector<8x768xf32>
    %c48 = arith.constant 48 : index
    %c0_8 = arith.constant 0 : index
    %13 = vector.load %arg9[%c48, %c0_8] : memref<72x768xf32, #tpu.memory_space<vmem>>, vector<8x768xf32>
    tpu.vector_store %arg9[%c48, %c0_8], %12 {strides = array<i32>} : memref<72x768xf32, #tpu.memory_space<vmem>>, vector<8x768xf32>,
    %c731_i32 = arith.constant 731 : i32
    %14 = tpu.dynamic_rotate %0 by %c731_i32 dim 1 : vector<8x768xf32>, i32 -> vector<8x768xf32>
    %c56 = arith.constant 56 : index
    %c0_9 = arith.constant 0 : index
    %15 = vector.load %arg9[%c56, %c0_9] : memref<72x768xf32, #tpu.memory_space<vmem>>, vector<8x768xf32>
    tpu.vector_store %arg9[%c56, %c0_9], %14 {strides = array<i32>} : memref<72x768xf32, #tpu.memory_space<vmem>>, vector<8x768xf32>,
    %c730_i32 = arith.constant 730 : i32
    %16 = tpu.dynamic_rotate %0 by %c730_i32 dim 1 : vector<8x768xf32>, i32 -> vector<8x768xf32>
    %c64 = arith.constant 64 : index
    %c0_10 = arith.constant 0 : index
    %17 = vector.load %arg9[%c64, %c0_10] : memref<72x768xf32, #tpu.memory_space<vmem>>, vector<8x768xf32>
    tpu.vector_store %arg9[%c64, %c0_10], %16 {strides = array<i32>} : memref<72x768xf32, #tpu.memory_space<vmem>>, vector<8x768xf32>,
    %c0_11 = arith.constant 0 : index
    %c0_12 = arith.constant 0 : index
    %18 = vector.load %arg2[%c0_11, %c0_12] : memref<8x72xf32, #tpu.memory_space<vmem>>, vector<8x72xf32>
    %c0_13 = arith.constant 0 : index
    %c0_14 = arith.constant 0 : index
    %19 = vector.load %arg9[%c0_13, %c0_14] : memref<72x768xf32, #tpu.memory_space<vmem>>, vector<72x768xf32>
    %cst = arith.constant dense<0.000000e+00> : vector<8x768xf32>
    %20 = tpu.matmul %18, %19, %cst {dimension_numbers = #tpu.dot_dimension_numbers<[1], [0], [0], [1], [0, 0, 1, 1], [], []>} : vector<8x72xf32>, vector<72x768xf32>, vector<8x768xf32> -> vector<8x768xf32>
    %c0_15 = arith.constant 0 : index
    %c0_16 = arith.constant 0 : index
    %21 = vector.load %arg3[%c0_15, %c0_16] : memref<8x1xf32, #tpu.memory_space<vmem>>, vector<8x1xf32>
    %22 = vector.broadcast %21 : vector<8x1xf32> to vector<8x768xf32>
    %23 = arith.addf %20, %22 : vector<8x768xf32>
    %cst_17 = arith.constant 0.000000e+00 : f32
    %24 = vector.broadcast %cst_17 : f32 to vector<8x768xf32>
    %c0_18 = arith.constant 0 : index
    %c0_19 = arith.constant 0 : index
    %25 = vector.load %arg7[%c0_18, %c0_19] : memref<2x768xf32, #tpu.memory_space<vmem>>, vector<1x768xf32>
    %26 = vector.broadcast %25 : vector<1x768xf32> to vector<8x768xf32>
    %27 = arith.mulf %23, %26 : vector<8x768xf32>
    %cst_20 = arith.constant dense<0.000000e+00> : vector<8xf32>
    %28 = vector.multi_reduction <add>, %27, %cst_20 [1] : vector<8x768xf32> to vector<8xf32>
    %29 = vector.shape_cast %28 : vector<8xf32> to vector<8x1xf32>
    %cst_21 = arith.constant 3.906250e-03 : f32
    %30 = vector.broadcast %cst_21 : f32 to vector<8x1xf32>
    %31 = arith.mulf %29, %30 : vector<8x1xf32>
    %32 = vector.broadcast %25 : vector<1x768xf32> to vector<8x768xf32>
    %33 = vector.broadcast %31 : vector<8x1xf32> to vector<8x768xf32>
    %34 = arith.mulf %32, %33 : vector<8x768xf32>
    %35 = arith.addf %24, %34 : vector<8x768xf32>
    %c1 = arith.constant 1 : index
    %c0_22 = arith.constant 0 : index
    %36 = vector.load %arg7[%c1, %c0_22] : memref<2x768xf32, #tpu.memory_space<vmem>>, vector<1x768xf32>
    %37 = vector.broadcast %36 : vector<1x768xf32> to vector<8x768xf32>
    %38 = arith.mulf %23, %37 : vector<8x768xf32>
    %cst_23 = arith.constant dense<0.000000e+00> : vector<8xf32>
    %39 = vector.multi_reduction <add>, %38, %cst_23 [1] : vector<8x768xf32> to vector<8xf32>
    %40 = vector.shape_cast %39 : vector<8xf32> to vector<8x1xf32>
    %cst_24 = arith.constant 3.906250e-03 : f32
    %41 = vector.broadcast %cst_24 : f32 to vector<8x1xf32>
    %42 = arith.mulf %40, %41 : vector<8x1xf32>
    %43 = vector.broadcast %36 : vector<1x768xf32> to vector<8x768xf32>
    %44 = vector.broadcast %42 : vector<8x1xf32> to vector<8x768xf32>
    %45 = arith.mulf %43, %44 : vector<8x768xf32>
    %46 = arith.addf %35, %45 : vector<8x768xf32>
    %47 = arith.subf %23, %46 : vector<8x768xf32>
    %cst_25 = arith.constant 0.000000e+00 : f32
    %48 = vector.broadcast %cst_25 : f32 to vector<8x768xf32>
    %c0_26 = arith.constant 0 : index
    %c0_27 = arith.constant 0 : index
    %49 = vector.load %arg7[%c0_26, %c0_27] : memref<2x768xf32, #tpu.memory_space<vmem>>, vector<1x768xf32>
    %50 = arith.mulf %47, %47 : vector<8x768xf32>
    %51 = vector.broadcast %49 : vector<1x768xf32> to vector<8x768xf32>
    %52 = arith.mulf %50, %51 : vector<8x768xf32>
    %cst_28 = arith.constant dense<0.000000e+00> : vector<8xf32>
    %53 = vector.multi_reduction <add>, %52, %cst_28 [1] : vector<8x768xf32> to vector<8xf32>
    %54 = vector.shape_cast %53 : vector<8xf32> to vector<8x1xf32>
    %cst_29 = arith.constant 3.906250e-03 : f32
    %55 = vector.broadcast %cst_29 : f32 to vector<8x1xf32>
    %56 = arith.mulf %54, %55 : vector<8x1xf32>
    %57 = vector.broadcast %49 : vector<1x768xf32> to vector<8x768xf32>
    %58 = vector.broadcast %56 : vector<8x1xf32> to vector<8x768xf32>
    %59 = arith.mulf %57, %58 : vector<8x768xf32>
    %60 = arith.addf %48, %59 : vector<8x768xf32>
    %c1_30 = arith.constant 1 : index
    %c0_31 = arith.constant 0 : index
    %61 = vector.load %arg7[%c1_30, %c0_31] : memref<2x768xf32, #tpu.memory_space<vmem>>, vector<1x768xf32>
    %62 = arith.mulf %47, %47 : vector<8x768xf32>
    %63 = vector.broadcast %61 : vector<1x768xf32> to vector<8x768xf32>
    %64 = arith.mulf %62, %63 : vector<8x768xf32>
    %cst_32 = arith.constant dense<0.000000e+00> : vector<8xf32>
    %65 = vector.multi_reduction <add>, %64, %cst_32 [1] : vector<8x768xf32> to vector<8xf32>
    %66 = vector.shape_cast %65 : vector<8xf32> to vector<8x1xf32>
    %cst_33 = arith.constant 3.906250e-03 : f32
    %67 = vector.broadcast %cst_33 : f32 to vector<8x1xf32>
    %68 = arith.mulf %66, %67 : vector<8x1xf32>
    %69 = vector.broadcast %61 : vector<1x768xf32> to vector<8x768xf32>
    %70 = vector.broadcast %68 : vector<8x1xf32> to vector<8x768xf32>
    %71 = arith.mulf %69, %70 : vector<8x768xf32>
    %72 = arith.addf %60, %71 : vector<8x768xf32>
    %cst_34 = arith.constant 9.99999974E-6 : f32
    %73 = vector.broadcast %cst_34 : f32 to vector<8x768xf32>
    %74 = arith.addf %72, %73 : vector<8x768xf32>
    %75 = math.rsqrt %74 : vector<8x768xf32>
    %76 = arith.mulf %47, %75 : vector<8x768xf32>
    %cst_35 = arith.constant 0.000000e+00 : f32
    %77 = vector.broadcast %cst_35 : f32 to vector<8x768xf32>
    %78 = arith.maximumf %76, %77 : vector<8x768xf32>
    %c0_36 = arith.constant 0 : index
    %c0_37 = arith.constant 0 : index
    %79 = vector.load %arg6[%c0_36, %c0_37] : memref<6x768xf32, #tpu.memory_space<vmem>>, vector<1x768xf32>
    %c767_i32_38 = arith.constant 767 : i32
    %80 = tpu.dynamic_rotate %78 by %c767_i32_38 dim 1 : vector<8x768xf32>, i32 -> vector<8x768xf32>
    %81 = vector.broadcast %79 : vector<1x768xf32> to vector<8x768xf32>
    %82 = arith.mulf %81, %80 : vector<8x768xf32>
    %c1_39 = arith.constant 1 : index
    %c0_40 = arith.constant 0 : index
    %83 = vector.load %arg6[%c1_39, %c0_40] : memref<6x768xf32, #tpu.memory_space<vmem>>, vector<1x768xf32>
    %c1_i32 = arith.constant 1 : i32
    %84 = tpu.dynamic_rotate %78 by %c1_i32 dim 1 : vector<8x768xf32>, i32 -> vector<8x768xf32>
    %85 = vector.broadcast %83 : vector<1x768xf32> to vector<8x768xf32>
    %86 = arith.mulf %85, %84 : vector<8x768xf32>
    %87 = arith.addf %82, %86 : vector<8x768xf32>
    %c2 = arith.constant 2 : index
    %c0_41 = arith.constant 0 : index
    %88 = vector.load %arg6[%c2, %c0_41] : memref<6x768xf32, #tpu.memory_space<vmem>>, vector<1x768xf32>
    %c3_i32 = arith.constant 3 : i32
    %89 = tpu.dynamic_rotate %78 by %c3_i32 dim 1 : vector<8x768xf32>, i32 -> vector<8x768xf32>
    %90 = vector.broadcast %88 : vector<1x768xf32> to vector<8x768xf32>
    %91 = arith.mulf %90, %89 : vector<8x768xf32>
    %92 = arith.addf %87, %91 : vector<8x768xf32>
    %c3 = arith.constant 3 : index
    %c0_42 = arith.constant 0 : index
    %93 = vector.load %arg6[%c3, %c0_42] : memref<6x768xf32, #tpu.memory_space<vmem>>, vector<1x768xf32>
    %c750_i32_43 = arith.constant 750 : i32
    %94 = tpu.dynamic_rotate %92 by %c750_i32_43 dim 1 : vector<8x768xf32>, i32 -> vector<8x768xf32>
    %95 = vector.broadcast %93 : vector<1x768xf32> to vector<8x768xf32>
    %96 = arith.mulf %95, %94 : vector<8x768xf32>
    %c4 = arith.constant 4 : index
    %c0_44 = arith.constant 0 : index
    %97 = vector.load %arg6[%c4, %c0_44] : memref<6x768xf32, #tpu.memory_space<vmem>>, vector<1x768xf32>
    %c18_i32 = arith.constant 18 : i32
    %98 = tpu.dynamic_rotate %92 by %c18_i32 dim 1 : vector<8x768xf32>, i32 -> vector<8x768xf32>
    %99 = vector.broadcast %97 : vector<1x768xf32> to vector<8x768xf32>
    %100 = arith.mulf %99, %98 : vector<8x768xf32>
    %101 = arith.addf %96, %100 : vector<8x768xf32>
    %c5 = arith.constant 5 : index
    %c0_45 = arith.constant 0 : index
    %102 = vector.load %arg6[%c5, %c0_45] : memref<6x768xf32, #tpu.memory_space<vmem>>, vector<1x768xf32>
    %c54_i32 = arith.constant 54 : i32
    %103 = tpu.dynamic_rotate %92 by %c54_i32 dim 1 : vector<8x768xf32>, i32 -> vector<8x768xf32>
    %104 = vector.broadcast %102 : vector<1x768xf32> to vector<8x768xf32>
    %105 = arith.mulf %104, %103 : vector<8x768xf32>
    %106 = arith.addf %101, %105 : vector<8x768xf32>
    %c0_46 = arith.constant 0 : index
    %c0_47 = arith.constant 0 : index
    %107 = vector.load %arg9[%c0_46, %c0_47] : memref<72x768xf32, #tpu.memory_space<vmem>>, vector<8x768xf32>
    tpu.vector_store %arg9[%c0_46, %c0_47], %106 {strides = array<i32>} : memref<72x768xf32, #tpu.memory_space<vmem>>, vector<8x768xf32>,
    %c767_i32_48 = arith.constant 767 : i32
    %108 = tpu.dynamic_rotate %106 by %c767_i32_48 dim 1 : vector<8x768xf32>, i32 -> vector<8x768xf32>
    %c8_49 = arith.constant 8 : index
    %c0_50 = arith.constant 0 : index
    %109 = vector.load %arg9[%c8_49, %c0_50] : memref<72x768xf32, #tpu.memory_space<vmem>>, vector<8x768xf32>
    tpu.vector_store %arg9[%c8_49, %c0_50], %108 {strides = array<i32>} : memref<72x768xf32, #tpu.memory_space<vmem>>, vector<8x768xf32>,
    %c766_i32_51 = arith.constant 766 : i32
    %110 = tpu.dynamic_rotate %106 by %c766_i32_51 dim 1 : vector<8x768xf32>, i32 -> vector<8x768xf32>
    %c16_52 = arith.constant 16 : index
    %c0_53 = arith.constant 0 : index
    %111 = vector.load %arg9[%c16_52, %c0_53] : memref<72x768xf32, #tpu.memory_space<vmem>>, vector<8x768xf32>
    tpu.vector_store %arg9[%c16_52, %c0_53], %110 {strides = array<i32>} : memref<72x768xf32, #tpu.memory_space<vmem>>, vector<8x768xf32>,
    %c750_i32_54 = arith.constant 750 : i32
    %112 = tpu.dynamic_rotate %106 by %c750_i32_54 dim 1 : vector<8x768xf32>, i32 -> vector<8x768xf32>
    %c24_55 = arith.constant 24 : index
    %c0_56 = arith.constant 0 : index
    %113 = vector.load %arg9[%c24_55, %c0_56] : memref<72x768xf32, #tpu.memory_space<vmem>>, vector<8x768xf32>
    tpu.vector_store %arg9[%c24_55, %c0_56], %112 {strides = array<i32>} : memref<72x768xf32, #tpu.memory_space<vmem>>, vector<8x768xf32>,
    %c749_i32_57 = arith.constant 749 : i32
    %114 = tpu.dynamic_rotate %106 by %c749_i32_57 dim 1 : vector<8x768xf32>, i32 -> vector<8x768xf32>
    %c32_58 = arith.constant 32 : index
    %c0_59 = arith.constant 0 : index
    %115 = vector.load %arg9[%c32_58, %c0_59] : memref<72x768xf32, #tpu.memory_space<vmem>>, vector<8x768xf32>
    tpu.vector_store %arg9[%c32_58, %c0_59], %114 {strides = array<i32>} : memref<72x768xf32, #tpu.memory_space<vmem>>, vector<8x768xf32>,
    %c748_i32_60 = arith.constant 748 : i32
    %116 = tpu.dynamic_rotate %106 by %c748_i32_60 dim 1 : vector<8x768xf32>, i32 -> vector<8x768xf32>
    %c40_61 = arith.constant 40 : index
    %c0_62 = arith.constant 0 : index
    %117 = vector.load %arg9[%c40_61, %c0_62] : memref<72x768xf32, #tpu.memory_space<vmem>>, vector<8x768xf32>
    tpu.vector_store %arg9[%c40_61, %c0_62], %116 {strides = array<i32>} : memref<72x768xf32, #tpu.memory_space<vmem>>, vector<8x768xf32>,
    %c732_i32_63 = arith.constant 732 : i32
    %118 = tpu.dynamic_rotate %106 by %c732_i32_63 dim 1 : vector<8x768xf32>, i32 -> vector<8x768xf32>
    %c48_64 = arith.constant 48 : index
    %c0_65 = arith.constant 0 : index
    %119 = vector.load %arg9[%c48_64, %c0_65] : memref<72x768xf32, #tpu.memory_space<vmem>>, vector<8x768xf32>
    tpu.vector_store %arg9[%c48_64, %c0_65], %118 {strides = array<i32>} : memref<72x768xf32, #tpu.memory_space<vmem>>, vector<8x768xf32>,
    %c731_i32_66 = arith.constant 731 : i32
    %120 = tpu.dynamic_rotate %106 by %c731_i32_66 dim 1 : vector<8x768xf32>, i32 -> vector<8x768xf32>
    %c56_67 = arith.constant 56 : index
    %c0_68 = arith.constant 0 : index
    %121 = vector.load %arg9[%c56_67, %c0_68] : memref<72x768xf32, #tpu.memory_space<vmem>>, vector<8x768xf32>
    tpu.vector_store %arg9[%c56_67, %c0_68], %120 {strides = array<i32>} : memref<72x768xf32, #tpu.memory_space<vmem>>, vector<8x768xf32>,
    %c730_i32_69 = arith.constant 730 : i32
    %122 = tpu.dynamic_rotate %106 by %c730_i32_69 dim 1 : vector<8x768xf32>, i32 -> vector<8x768xf32>
    %c64_70 = arith.constant 64 : index
    %c0_71 = arith.constant 0 : index
    %123 = vector.load %arg9[%c64_70, %c0_71] : memref<72x768xf32, #tpu.memory_space<vmem>>, vector<8x768xf32>
    tpu.vector_store %arg9[%c64_70, %c0_71], %122 {strides = array<i32>} : memref<72x768xf32, #tpu.memory_space<vmem>>, vector<8x768xf32>,
    %c0_72 = arith.constant 0 : index
    %c0_73 = arith.constant 0 : index
    %124 = vector.load %arg4[%c0_72, %c0_73] : memref<8x72xf32, #tpu.memory_space<vmem>>, vector<8x72xf32>
    %c0_74 = arith.constant 0 : index
    %c0_75 = arith.constant 0 : index
    %125 = vector.load %arg9[%c0_74, %c0_75] : memref<72x768xf32, #tpu.memory_space<vmem>>, vector<72x768xf32>
    %cst_76 = arith.constant dense<0.000000e+00> : vector<8x768xf32>
    %126 = tpu.matmul %124, %125, %cst_76 {dimension_numbers = #tpu.dot_dimension_numbers<[1], [0], [0], [1], [0, 0, 1, 1], [], []>} : vector<8x72xf32>, vector<72x768xf32>, vector<8x768xf32> -> vector<8x768xf32>
    %c0_77 = arith.constant 0 : index
    %c0_78 = arith.constant 0 : index
    %127 = vector.load %arg5[%c0_77, %c0_78] : memref<8x1xf32, #tpu.memory_space<vmem>>, vector<8x1xf32>
    %128 = vector.broadcast %127 : vector<8x1xf32> to vector<8x768xf32>
    %129 = arith.addf %126, %128 : vector<8x768xf32>
    %cst_79 = arith.constant 0.000000e+00 : f32
    %130 = vector.broadcast %cst_79 : f32 to vector<8x768xf32>
    %c0_80 = arith.constant 0 : index
    %c0_81 = arith.constant 0 : index
    %131 = vector.load %arg7[%c0_80, %c0_81] : memref<2x768xf32, #tpu.memory_space<vmem>>, vector<1x768xf32>
    %132 = vector.broadcast %131 : vector<1x768xf32> to vector<8x768xf32>
    %133 = arith.mulf %129, %132 : vector<8x768xf32>
    %cst_82 = arith.constant dense<0.000000e+00> : vector<8xf32>
    %134 = vector.multi_reduction <add>, %133, %cst_82 [1] : vector<8x768xf32> to vector<8xf32>
    %135 = vector.shape_cast %134 : vector<8xf32> to vector<8x1xf32>
    %cst_83 = arith.constant 3.906250e-03 : f32
    %136 = vector.broadcast %cst_83 : f32 to vector<8x1xf32>
    %137 = arith.mulf %135, %136 : vector<8x1xf32>
    %138 = vector.broadcast %131 : vector<1x768xf32> to vector<8x768xf32>
    %139 = vector.broadcast %137 : vector<8x1xf32> to vector<8x768xf32>
    %140 = arith.mulf %138, %139 : vector<8x768xf32>
    %141 = arith.addf %130, %140 : vector<8x768xf32>
    %c1_84 = arith.constant 1 : index
    %c0_85 = arith.constant 0 : index
    %142 = vector.load %arg7[%c1_84, %c0_85] : memref<2x768xf32, #tpu.memory_space<vmem>>, vector<1x768xf32>
    %143 = vector.broadcast %142 : vector<1x768xf32> to vector<8x768xf32>
    %144 = arith.mulf %129, %143 : vector<8x768xf32>
    %cst_86 = arith.constant dense<0.000000e+00> : vector<8xf32>
    %145 = vector.multi_reduction <add>, %144, %cst_86 [1] : vector<8x768xf32> to vector<8xf32>
    %146 = vector.shape_cast %145 : vector<8xf32> to vector<8x1xf32>
    %cst_87 = arith.constant 3.906250e-03 : f32
    %147 = vector.broadcast %cst_87 : f32 to vector<8x1xf32>
    %148 = arith.mulf %146, %147 : vector<8x1xf32>
    %149 = vector.broadcast %142 : vector<1x768xf32> to vector<8x768xf32>
    %150 = vector.broadcast %148 : vector<8x1xf32> to vector<8x768xf32>
    %151 = arith.mulf %149, %150 : vector<8x768xf32>
    %152 = arith.addf %141, %151 : vector<8x768xf32>
    %153 = arith.subf %129, %152 : vector<8x768xf32>
    %cst_88 = arith.constant 0.000000e+00 : f32
    %154 = vector.broadcast %cst_88 : f32 to vector<8x768xf32>
    %c0_89 = arith.constant 0 : index
    %c0_90 = arith.constant 0 : index
    %155 = vector.load %arg7[%c0_89, %c0_90] : memref<2x768xf32, #tpu.memory_space<vmem>>, vector<1x768xf32>
    %156 = arith.mulf %153, %153 : vector<8x768xf32>
    %157 = vector.broadcast %155 : vector<1x768xf32> to vector<8x768xf32>
    %158 = arith.mulf %156, %157 : vector<8x768xf32>
    %cst_91 = arith.constant dense<0.000000e+00> : vector<8xf32>
    %159 = vector.multi_reduction <add>, %158, %cst_91 [1] : vector<8x768xf32> to vector<8xf32>
    %160 = vector.shape_cast %159 : vector<8xf32> to vector<8x1xf32>
    %cst_92 = arith.constant 3.906250e-03 : f32
    %161 = vector.broadcast %cst_92 : f32 to vector<8x1xf32>
    %162 = arith.mulf %160, %161 : vector<8x1xf32>
    %163 = vector.broadcast %155 : vector<1x768xf32> to vector<8x768xf32>
    %164 = vector.broadcast %162 : vector<8x1xf32> to vector<8x768xf32>
    %165 = arith.mulf %163, %164 : vector<8x768xf32>
    %166 = arith.addf %154, %165 : vector<8x768xf32>
    %c1_93 = arith.constant 1 : index
    %c0_94 = arith.constant 0 : index
    %167 = vector.load %arg7[%c1_93, %c0_94] : memref<2x768xf32, #tpu.memory_space<vmem>>, vector<1x768xf32>
    %168 = arith.mulf %153, %153 : vector<8x768xf32>
    %169 = vector.broadcast %167 : vector<1x768xf32> to vector<8x768xf32>
    %170 = arith.mulf %168, %169 : vector<8x768xf32>
    %cst_95 = arith.constant dense<0.000000e+00> : vector<8xf32>
    %171 = vector.multi_reduction <add>, %170, %cst_95 [1] : vector<8x768xf32> to vector<8xf32>
    %172 = vector.shape_cast %171 : vector<8xf32> to vector<8x1xf32>
    %cst_96 = arith.constant 3.906250e-03 : f32
    %173 = vector.broadcast %cst_96 : f32 to vector<8x1xf32>
    %174 = arith.mulf %172, %173 : vector<8x1xf32>
    %175 = vector.broadcast %167 : vector<1x768xf32> to vector<8x768xf32>
    %176 = vector.broadcast %174 : vector<8x1xf32> to vector<8x768xf32>
    %177 = arith.mulf %175, %176 : vector<8x768xf32>
    %178 = arith.addf %166, %177 : vector<8x768xf32>
    %cst_97 = arith.constant 9.99999974E-6 : f32
    %179 = vector.broadcast %cst_97 : f32 to vector<8x768xf32>
    %180 = arith.addf %178, %179 : vector<8x768xf32>
    %181 = math.rsqrt %180 : vector<8x768xf32>
    %182 = arith.mulf %153, %181 : vector<8x768xf32>
    %c749_i32_98 = arith.constant 749 : i32
    %183 = tpu.dynamic_rotate %0 by %c749_i32_98 dim 1 : vector<8x768xf32>, i32 -> vector<8x768xf32>
    %184 = arith.addf %183, %182 : vector<8x768xf32>
    %c0_99 = arith.constant 0 : index
    %c0_100 = arith.constant 0 : index
    %185 = vector.load %arg8[%c0_99, %c0_100] : memref<8x768xf32, #tpu.memory_space<vmem>>, vector<8x768xf32>
    tpu.vector_store %arg8[%c0_99, %c0_100], %184 {strides = array<i32>} : memref<8x768xf32, #tpu.memory_space<vmem>>, vector<8x768xf32>,
    return
  }
  func.func @transform_0(%arg0: i32) -> (i32, i32) {
    %c0_i32 = arith.constant 0 : i32
    %c0_i32_0 = arith.constant 0 : i32
    %c0_i32_1 = arith.constant 0 : i32
    return %c0_i32, %c0_i32_0 : i32, i32
  }
  func.func @transform_1(%arg0: i32) -> (i32, i32) {
    %c0_i32 = arith.constant 0 : i32
    %c0_i32_0 = arith.constant 0 : i32
    %c0_i32_1 = arith.constant 0 : i32
    return %c0_i32, %c0_i32_0 : i32, i32
  }
  func.func @transform_2(%arg0: i32) -> (i32, i32) {
    %c0_i32 = arith.constant 0 : i32
    %c0_i32_0 = arith.constant 0 : i32
    %c0_i32_1 = arith.constant 0 : i32
    return %c0_i32, %c0_i32_0 : i32, i32
  }
  func.func @transform_3(%arg0: i32) -> (i32, i32) {
    %c0_i32 = arith.constant 0 : i32
    %c0_i32_0 = arith.constant 0 : i32
    %c0_i32_1 = arith.constant 0 : i32
    return %c0_i32, %c0_i32_0 : i32, i32
  }
  func.func @transform_4(%arg0: i32) -> (i32, i32) {
    %c0_i32 = arith.constant 0 : i32
    %c0_i32_0 = arith.constant 0 : i32
    %c0_i32_1 = arith.constant 0 : i32
    return %c0_i32, %c0_i32_0 : i32, i32
  }
  func.func @transform_5(%arg0: i32) -> (i32, i32) {
    %c0_i32 = arith.constant 0 : i32
    %c0_i32_0 = arith.constant 0 : i32
    %c0_i32_1 = arith.constant 0 : i32
    return %c0_i32, %c0_i32_0 : i32, i32
  }
  func.func @transform_6(%arg0: i32) -> (i32, i32) {
    %c0_i32 = arith.constant 0 : i32
    %c0_i32_0 = arith.constant 0 : i32
    %c0_i32_1 = arith.constant 0 : i32
    return %c0_i32, %c0_i32_0 : i32, i32
  }
  func.func @transform_7(%arg0: i32) -> (i32, i32) {
    %c0_i32 = arith.constant 0 : i32
    %c0_i32_0 = arith.constant 0 : i32
    %c0_i32_1 = arith.constant 0 : i32
    return %c0_i32, %c0_i32_0 : i32, i32
  }
}

</mosaic_0001>

<llo_original>
// kernel: resnet_block_forward.1
$region0: #{resnet_block_forward.1}
  #allocation0 [shape = 'u32[]', space=smem, size = 0x4, offset = 0x4, fixed_abs, tag = 'smem constant byte address 0x4 - core index']
  #allocation1 [shape = 'u32[72,128]{1,0:T(1,128)}', space=vmem, size = 0x9000, scoped, tag = 'internal scratch']
  #allocation2 [shape = 'f32[72,768]{1,0:T(8,128)}', space=vmem, size = 0x36000, scoped, tag = 'scratch operand']
  %s0 = inlined_call_operand.vmem [shape: f32[8,768], index: 0, kind: input, shape index: {}]
  %s1 = inlined_call_operand.vmem [shape: f32[8,72], index: 1, kind: input, shape index: {}]
  %s2 = inlined_call_operand.vmem [shape: f32[8,1], index: 2, kind: input, shape index: {}]
  %s3 = inlined_call_operand.vmem [shape: f32[8,72], index: 3, kind: input, shape index: {}]
  %s4 = inlined_call_operand.vmem [shape: f32[8,1], index: 4, kind: input, shape index: {}]
  %s5 = inlined_call_operand.vmem [shape: f32[6,768], index: 5, kind: input, shape index: {}]
  %s6 = inlined_call_operand.vmem [shape: f32[2,768], index: 6, kind: input, shape index: {}]
  %s7 = inlined_call_operand.vmem [shape: f32[8,768], index: 7, kind: output, shape index: {}]
  %s8 = sld [smem:[#allocation0]]
  $region38: #{resnet_block_forward.1} parent=0
    _
  %s10 = ssub.s32 1, %s8
  %s11 = scalar_select 0, %s10, %s8
  // Predicated region
  $region2: #{resnet_block_forward.1} parent=0 // pred_check
    _
  $region3: #{resnet_block_forward.1} parent=0 // pred_check_branch
    %13 = sbr.rel (0) target = $region5
  $region4: #{resnet_block_forward.1} parent=0 // pred_region
    _
  $region5: #{resnet_block_forward.1} parent=0 // pred_fallthru
    _
  // Predicated region
  $region6: #{resnet_block_forward.1} parent=0 // pred_check
    _
  $region7: #{resnet_block_forward.1} parent=0 // pred_check_branch
    %15 = sbr.rel (0) target = $region9
  $region8: #{resnet_block_forward.1} parent=0 // pred_region
    _
  $region9: #{resnet_block_forward.1} parent=0 // pred_fallthru
    _
  // Predicated region
  $region10: #{resnet_block_forward.1} parent=0 // pred_check
    _
  $region11: #{resnet_block_forward.1} parent=0 // pred_check_branch
    %17 = sbr.rel (0) target = $region13
  $region12: #{resnet_block_forward.1} parent=0 // pred_region
    _
  $region13: #{resnet_block_forward.1} parent=0 // pred_fallthru
    _
  // Predicated region
  $region14: #{resnet_block_forward.1} parent=0 // pred_check
    _
  $region15: #{resnet_block_forward.1} parent=0 // pred_check_branch
    %19 = sbr.rel (0) target = $region17
  $region16: #{resnet_block_forward.1} parent=0 // pred_region
    _
  $region17: #{resnet_block_forward.1} parent=0 // pred_fallthru
    _
  // Predicated region
  $region18: #{resnet_block_forward.1} parent=0 // pred_check
    _
  $region19: #{resnet_block_forward.1} parent=0 // pred_check_branch
    %21 = sbr.rel (0) target = $region21
  $region20: #{resnet_block_forward.1} parent=0 // pred_region
    _
  $region21: #{resnet_block_forward.1} parent=0 // pred_fallthru
    _
  // Predicated region
  $region22: #{resnet_block_forward.1} parent=0 // pred_check
    _
  $region23: #{resnet_block_forward.1} parent=0 // pred_check_branch
    %23 = sbr.rel (0) target = $region25
  $region24: #{resnet_block_forward.1} parent=0 // pred_region
    _
  $region25: #{resnet_block_forward.1} parent=0 // pred_fallthru
    _
  // Predicated region
  $region26: #{resnet_block_forward.1} parent=0 // pred_check
    _
  $region27: #{resnet_block_forward.1} parent=0 // pred_check_branch
    %25 = sbr.rel (0) target = $region29
  $region28: #{resnet_block_forward.1} parent=0 // pred_region
    _
  $region29: #{resnet_block_forward.1} parent=0 // pred_fallthru
    _
  %v26 = vld [vmem:[%s0] sm:$0xff]
  %v27 = vld [vmem:[%s0 + $0x8] sm:$0xff]
  %v28 = vld [vmem:[%s0 + $0x10] sm:$0xff]
  %v29 = vld [vmem:[%s0 + $0x18] sm:$0xff]
  %v30 = vld [vmem:[%s0 + $0x20] sm:$0xff]
  %v31 = vld [vmem:[%s0 + $0x28] sm:$0xff]
  %32 = vst [vmem:[#allocation2] sm:$0xff] %v26
  %33 = vst [vmem:[#allocation2 + $0x8] sm:$0xff] %v27
  %34 = vst [vmem:[#allocation2 + $0x10] sm:$0xff] %v28
  %35 = vst [vmem:[#allocation2 + $0x18] sm:$0xff] %v29
  %36 = vst [vmem:[#allocation2 + $0x20] sm:$0xff] %v30
  %37 = vst [vmem:[#allocation2 + $0x28] sm:$0xff] %v31
  %38 = vrot.lane.b32.xlu0 %v26, 127
  %v39 = vpop.permute.xlu0 %38
  %40 = vrot.lane.b32.xlu0 %v27, 127
  %v41 = vpop.permute.xlu0 %40
  %42 = vrot.lane.b32.xlu0 %v28, 127
  %v43 = vpop.permute.xlu0 %42
  %44 = vrot.lane.b32.xlu0 %v29, 127
  %v45 = vpop.permute.xlu0 %44
  %46 = vrot.lane.b32.xlu0 %v30, 127
  %v47 = vpop.permute.xlu0 %46
  %48 = vrot.lane.b32.xlu0 %v31, 127
  %v49 = vpop.permute.xlu0 %48
  %v50 = vlaneseq
  %v51 = vand.u32 %v50, 127
  %vm52 = vcmp.lt.s32.totalorder %v51, 127
  %v53 = vsel %vm52, %v47, %v49
  %v54 = vsel %vm52, %v45, %v47
  %v55 = vsel %vm52, %v43, %v45
  %v56 = vsel %vm52, %v41, %v43
  %v57 = vsel %vm52, %v39, %v41
  %v58 = vsel %vm52, %v49, %v39
  %59 = vst [vmem:[#allocation2 + $0x30] sm:$0xff] %v57
  %60 = vst [vmem:[#allocation2 + $0x38] sm:$0xff] %v56
  %61 = vst [vmem:[#allocation2 + $0x40] sm:$0xff] %v55
  %62 = vst [vmem:[#allocation2 + $0x48] sm:$0xff] %v54
  %63 = vst [vmem:[#allocation2 + $0x50] sm:$0xff] %v53
  %64 = vst [vmem:[#allocation2 + $0x58] sm:$0xff] %v58
  %65 = vrot.lane.b32.xlu0 %v26, 126
  %v66 = vpop.permute.xlu0 %65
  %67 = vrot.lane.b32.xlu0 %v27, 126
  %v68 = vpop.permute.xlu0 %67
  %69 = vrot.lane.b32.xlu0 %v28, 126
  %v70 = vpop.permute.xlu0 %69
  %71 = vrot.lane.b32.xlu0 %v29, 126
  %v72 = vpop.permute.xlu0 %71
  %73 = vrot.lane.b32.xlu0 %v30, 126
  %v74 = vpop.permute.xlu0 %73
  %75 = vrot.lane.b32.xlu0 %v31, 126
  %v76 = vpop.permute.xlu0 %75
  %vm77 = vcmp.lt.s32.totalorder %v51, 126
  %v78 = vsel %vm77, %v74, %v76
  %v79 = vsel %vm77, %v72, %v74
  %v80 = vsel %vm77, %v70, %v72
  %v81 = vsel %vm77, %v68, %v70
  %v82 = vsel %vm77, %v66, %v68
  %v83 = vsel %vm77, %v76, %v66
  %84 = vst [vmem:[#allocation2 + $0x60] sm:$0xff] %v82
  %85 = vst [vmem:[#allocation2 + $0x68] sm:$0xff] %v81
  %86 = vst [vmem:[#allocation2 + $0x70] sm:$0xff] %v80
  %87 = vst [vmem:[#allocation2 + $0x78] sm:$0xff] %v79
  %88 = vst [vmem:[#allocation2 + $0x80] sm:$0xff] %v78
  %89 = vst [vmem:[#allocation2 + $0x88] sm:$0xff] %v83
  %90 = vrot.lane.b32.xlu0 %v26, 110
  %v91 = vpop.permute.xlu0 %90
  %92 = vrot.lane.b32.xlu0 %v27, 110
  %v93 = vpop.permute.xlu0 %92
  %94 = vrot.lane.b32.xlu0 %v28, 110
  %v95 = vpop.permute.xlu0 %94
  %96 = vrot.lane.b32.xlu0 %v29, 110
  %v97 = vpop.permute.xlu0 %96
  %98 = vrot.lane.b32.xlu0 %v30, 110
  %v99 = vpop.permute.xlu0 %98
  %100 = vrot.lane.b32.xlu0 %v31, 110
  %v101 = vpop.permute.xlu0 %100
  %vm102 = vcmp.lt.s32.totalorder %v51, 110
  %v103 = vsel %vm102, %v99, %v101
  %v104 = vsel %vm102, %v97, %v99
  %v105 = vsel %vm102, %v95, %v97
  %v106 = vsel %vm102, %v93, %v95
  %v107 = vsel %vm102, %v91, %v93
  %v108 = vsel %vm102, %v101, %v91
  %109 = vst [vmem:[#allocation2 + $0x90] sm:$0xff] %v107
  %110 = vst [vmem:[#allocation2 + $0x98] sm:$0xff] %v106
  %111 = vst [vmem:[#allocation2 + $0xa0] sm:$0xff] %v105
  %112 = vst [vmem:[#allocation2 + $0xa8] sm:$0xff] %v104
  %113 = vst [vmem:[#allocation2 + $0xb0] sm:$0xff] %v103
  %114 = vst [vmem:[#allocation2 + $0xb8] sm:$0xff] %v108
  %115 = vrot.lane.b32.xlu0 %v26, 109
  %v116 = vpop.permute.xlu0 %115
  %117 = vrot.lane.b32.xlu0 %v27, 109
  %v118 = vpop.permute.xlu0 %117
  %119 = vrot.lane.b32.xlu0 %v28, 109
  %v120 = vpop.permute.xlu0 %119
  %121 = vrot.lane.b32.xlu0 %v29, 109
  %v122 = vpop.permute.xlu0 %121
  %123 = vrot.lane.b32.xlu0 %v30, 109
  %v124 = vpop.permute.xlu0 %123
  %125 = vrot.lane.b32.xlu0 %v31, 109
  %v126 = vpop.permute.xlu0 %125
  %vm127 = vcmp.lt.s32.totalorder %v51, 109
  %v128 = vsel %vm127, %v124, %v126
  %v129 = vsel %vm127, %v122, %v124
  %v130 = vsel %vm127, %v120, %v122
  %v131 = vsel %vm127, %v118, %v120
  %v132 = vsel %vm127, %v116, %v118
  %v133 = vsel %vm127, %v126, %v116
  %134 = vst [vmem:[#allocation2 + $0xc0] sm:$0xff] %v132
  %135 = vst [vmem:[#allocation2 + $0xc8] sm:$0xff] %v131
  %136 = vst [vmem:[#allocation2 + $0xd0] sm:$0xff] %v130
  %137 = vst [vmem:[#allocation2 + $0xd8] sm:$0xff] %v129
  %138 = vst [vmem:[#allocation2 + $0xe0] sm:$0xff] %v128
  %139 = vst [vmem:[#allocation2 + $0xe8] sm:$0xff] %v133
  %140 = vrot.lane.b32.xlu0 %v26, 108
  %v141 = vpop.permute.xlu0 %140
  %142 = vrot.lane.b32.xlu0 %v27, 108
  %v143 = vpop.permute.xlu0 %142
  %144 = vrot.lane.b32.xlu0 %v28, 108
  %v145 = vpop.permute.xlu0 %144
  %146 = vrot.lane.b32.xlu0 %v29, 108
  %v147 = vpop.permute.xlu0 %146
  %148 = vrot.lane.b32.xlu0 %v30, 108
  %v149 = vpop.permute.xlu0 %148
  %150 = vrot.lane.b32.xlu0 %v31, 108
  %v151 = vpop.permute.xlu0 %150
  %vm152 = vcmp.lt.s32.totalorder %v51, 108
  %v153 = vsel %vm152, %v149, %v151
  %v154 = vsel %vm152, %v147, %v149
  %v155 = vsel %vm152, %v145, %v147
  %v156 = vsel %vm152, %v143, %v145
  %v157 = vsel %vm152, %v141, %v143
  %v158 = vsel %vm152, %v151, %v141
  %159 = vst [vmem:[#allocation2 + $0xf0] sm:$0xff] %v157
  %160 = vst [vmem:[#allocation2 + $0xf8] sm:$0xff] %v156
  %161 = vst [vmem:[#allocation2 + $0x100] sm:$0xff] %v155
  %162 = vst [vmem:[#allocation2 + $0x108] sm:$0xff] %v154
  %163 = vst [vmem:[#allocation2 + $0x110] sm:$0xff] %v153
  %164 = vst [vmem:[#allocation2 + $0x118] sm:$0xff] %v158
  %165 = vrot.lane.b32.xlu0 %v26, 92
  %v166 = vpop.permute.xlu0 %165
  %167 = vrot.lane.b32.xlu0 %v27, 92
  %v168 = vpop.permute.xlu0 %167
  %169 = vrot.lane.b32.xlu0 %v28, 92
  %v170 = vpop.permute.xlu0 %169
  %171 = vrot.lane.b32.xlu0 %v29, 92
  %v172 = vpop.permute.xlu0 %171
  %173 = vrot.lane.b32.xlu0 %v30, 92
  %v174 = vpop.permute.xlu0 %173
  %175 = vrot.lane.b32.xlu0 %v31, 92
  %v176 = vpop.permute.xlu0 %175
  %vm177 = vcmp.lt.s32.totalorder %v51, 92
  %v178 = vsel %vm177, %v174, %v176
  %v179 = vsel %vm177, %v172, %v174
  %v180 = vsel %vm177, %v170, %v172
  %v181 = vsel %vm177, %v168, %v170
  %v182 = vsel %vm177, %v166, %v168
  %v183 = vsel %vm177, %v176, %v166
  %184 = vst [vmem:[#allocation2 + $0x120] sm:$0xff] %v182
  %185 = vst [vmem:[#allocation2 + $0x128] sm:$0xff] %v181
  %186 = vst [vmem:[#allocation2 + $0x130] sm:$0xff] %v180
  %187 = vst [vmem:[#allocation2 + $0x138] sm:$0xff] %v179
  %188 = vst [vmem:[#allocation2 + $0x140] sm:$0xff] %v178
  %189 = vst [vmem:[#allocation2 + $0x148] sm:$0xff] %v183
  %190 = vrot.lane.b32.xlu0 %v26, 91
  %v191 = vpop.permute.xlu0 %190
  %192 = vrot.lane.b32.xlu0 %v27, 91
  %v193 = vpop.permute.xlu0 %192
  %194 = vrot.lane.b32.xlu0 %v28, 91
  %v195 = vpop.permute.xlu0 %194
  %196 = vrot.lane.b32.xlu0 %v29, 91
  %v197 = vpop.permute.xlu0 %196
  %198 = vrot.lane.b32.xlu0 %v30, 91
  %v199 = vpop.permute.xlu0 %198
  %200 = vrot.lane.b32.xlu0 %v31, 91
  %v201 = vpop.permute.xlu0 %200
  %vm202 = vcmp.lt.s32.totalorder %v51, 91
  %v203 = vsel %vm202, %v199, %v201
  %v204 = vsel %vm202, %v197, %v199
  %v205 = vsel %vm202, %v195, %v197
  %v206 = vsel %vm202, %v193, %v195
  %v207 = vsel %vm202, %v191, %v193
  %v208 = vsel %vm202, %v201, %v191
  %209 = vst [vmem:[#allocation2 + $0x150] sm:$0xff] %v207
  %210 = vst [vmem:[#allocation2 + $0x158] sm:$0xff] %v206
  %211 = vst [vmem:[#allocation2 + $0x160] sm:$0xff] %v205
  %212 = vst [vmem:[#allocation2 + $0x168] sm:$0xff] %v204
  %213 = vst [vmem:[#allocation2 + $0x170] sm:$0xff] %v203
  %214 = vst [vmem:[#allocation2 + $0x178] sm:$0xff] %v208
  %215 = vrot.lane.b32.xlu0 %v26, 90
  %v216 = vpop.permute.xlu0 %215
  %217 = vrot.lane.b32.xlu0 %v27, 90
  %v218 = vpop.permute.xlu0 %217
  %219 = vrot.lane.b32.xlu0 %v28, 90
  %v220 = vpop.permute.xlu0 %219
  %221 = vrot.lane.b32.xlu0 %v29, 90
  %v222 = vpop.permute.xlu0 %221
  %223 = vrot.lane.b32.xlu0 %v30, 90
  %v224 = vpop.permute.xlu0 %223
  %225 = vrot.lane.b32.xlu0 %v31, 90
  %v226 = vpop.permute.xlu0 %225
  %vm227 = vcmp.lt.s32.totalorder %v51, 90
  %v228 = vsel %vm227, %v224, %v226
  %v229 = vsel %vm227, %v222, %v224
  %v230 = vsel %vm227, %v220, %v222
  %v231 = vsel %vm227, %v218, %v220
  %v232 = vsel %vm227, %v216, %v218
  %v233 = vsel %vm227, %v226, %v216
  %234 = vst [vmem:[#allocation2 + $0x180] sm:$0xff] %v232
  %235 = vst [vmem:[#allocation2 + $0x188] sm:$0xff] %v231
  %236 = vst [vmem:[#allocation2 + $0x190] sm:$0xff] %v230
  %237 = vst [vmem:[#allocation2 + $0x198] sm:$0xff] %v229
  %238 = vst [vmem:[#allocation2 + $0x1a0] sm:$0xff] %v228
  %239 = vst [vmem:[#allocation2 + $0x1a8] sm:$0xff] %v233
  %v240 = vld [vmem:[%s1] sm:$0xff]
  %v241 = vld [vmem:[#allocation2] sm:$0xff]
  %v242 = vld [vmem:[#allocation2 + $0x8] sm:$0xff]
  %v243 = vld [vmem:[#allocation2 + $0x10] sm:$0xff]
  %v244 = vld [vmem:[#allocation2 + $0x18] sm:$0xff]
  %v245 = vld [vmem:[#allocation2 + $0x20] sm:$0xff]
  %v246 = vld [vmem:[#allocation2 + $0x28] sm:$0xff]
  %v247 = vld [vmem:[#allocation2 + $0x30] sm:$0xff]
  %v248 = vld [vmem:[#allocation2 + $0x38] sm:$0xff]
  %v249 = vld [vmem:[#allocation2 + $0x40] sm:$0xff]
  %v250 = vld [vmem:[#allocation2 + $0x48] sm:$0xff]
  %v251 = vld [vmem:[#allocation2 + $0x50] sm:$0xff]
  %v252 = vld [vmem:[#allocation2 + $0x58] sm:$0xff]
  %v253 = vld [vmem:[#allocation2 + $0x60] sm:$0xff]
  %v254 = vld [vmem:[#allocation2 + $0x68] sm:$0xff]
  %v255 = vld [vmem:[#allocation2 + $0x70] sm:$0xff]
  %v256 = vld [vmem:[#allocation2 + $0x78] sm:$0xff]
  %v257 = vld [vmem:[#allocation2 + $0x80] sm:$0xff]
  %v258 = vld [vmem:[#allocation2 + $0x88] sm:$0xff]
  %v259 = vld [vmem:[#allocation2 + $0x90] sm:$0xff]
  %v260 = vld [vmem:[#allocation2 + $0x98] sm:$0xff]
  %v261 = vld [vmem:[#allocation2 + $0xa0] sm:$0xff]
  %v262 = vld [vmem:[#allocation2 + $0xa8] sm:$0xff]
  %v263 = vld [vmem:[#allocation2 + $0xb0] sm:$0xff]
  %v264 = vld [vmem:[#allocation2 + $0xb8] sm:$0xff]
  %v265 = vld [vmem:[#allocation2 + $0xc0] sm:$0xff]
  %v266 = vld [vmem:[#allocation2 + $0xc8] sm:$0xff]
  %v267 = vld [vmem:[#allocation2 + $0xd0] sm:$0xff]
  %v268 = vld [vmem:[#allocation2 + $0xd8] sm:$0xff]
  %v269 = vld [vmem:[#allocation2 + $0xe0] sm:$0xff]
  %v270 = vld [vmem:[#allocation2 + $0xe8] sm:$0xff]
  %v271 = vld [vmem:[#allocation2 + $0xf0] sm:$0xff]
  %v272 = vld [vmem:[#allocation2 + $0xf8] sm:$0xff]
  %v273 = vld [vmem:[#allocation2 + $0x100] sm:$0xff]
  %v274 = vld [vmem:[#allocation2 + $0x108] sm:$0xff]
  %v275 = vld [vmem:[#allocation2 + $0x110] sm:$0xff]
  %v276 = vld [vmem:[#allocation2 + $0x118] sm:$0xff]
  %v277 = vld [vmem:[#allocation2 + $0x120] sm:$0xff]
  %v278 = vld [vmem:[#allocation2 + $0x128] sm:$0xff]
  %v279 = vld [vmem:[#allocation2 + $0x130] sm:$0xff]
  %v280 = vld [vmem:[#allocation2 + $0x138] sm:$0xff]
  %v281 = vld [vmem:[#allocation2 + $0x140] sm:$0xff]
  %v282 = vld [vmem:[#allocation2 + $0x148] sm:$0xff]
  %v283 = vld [vmem:[#allocation2 + $0x150] sm:$0xff]
  %v284 = vld [vmem:[#allocation2 + $0x158] sm:$0xff]
  %v285 = vld [vmem:[#allocation2 + $0x160] sm:$0xff]
  %v286 = vld [vmem:[#allocation2 + $0x168] sm:$0xff]
  %v287 = vld [vmem:[#allocation2 + $0x170] sm:$0xff]
  %v288 = vld [vmem:[#allocation2 + $0x178] sm:$0xff]
  %v289 = vld [vmem:[#allocation2 + $0x180] sm:$0xff]
  %v290 = vld [vmem:[#allocation2 + $0x188] sm:$0xff]
  %v291 = vld [vmem:[#allocation2 + $0x190] sm:$0xff]
  %v292 = vld [vmem:[#allocation2 + $0x198] sm:$0xff]
  %v293 = vld [vmem:[#allocation2 + $0x1a0] sm:$0xff]
  %v294 = vld [vmem:[#allocation2 + $0x1a8] sm:$0xff]
  %v295 = vld [vmem:[%s2] sm:$0xff]
  %297 = vset.pattern.permute.xlu0 0
  %298 = vperm.xlu0 %297, %v295
  %v299 = vpop.permute.xlu0 %298
  %vm301 = vcmask 588800
  %v303 = vsel %vm301, %v240, 0
  %305 = vmatpush.msra.mxu0 0.0
  %306 = vmatpush.msra.mxu0 0.0
  %307 = vmatpush.msra.mxu0 0.0
  %308 = vmatpush.msra.mxu0 0.0
  %309 = vmatpush.msra.mxu0 0.0
  %310 = vmatpush.msra.mxu0 0.0
  %311 = vmatpush.msra.mxu0 0.0
  %312 = vmatpush.msra.mxu0 %v289
  %313 = vmatpush.msra.mxu0 %v283
  %314 = vmatpush.msra.mxu0 %v277
  %315 = vmatpush.msra.mxu0 %v271
  %316 = vmatpush.msra.mxu0 %v265
  %317 = vmatpush.msra.mxu0 %v259
  %318 = vmatpush.msra.mxu0 %v253
  %319 = vmatpush.msra.mxu0 %v247
  %320 = vmatpush.msra.mxu0 %v241
  %321 = vmatmul.f32.gmra.mxu0 %v303
  %v322 = vpop.f32.mrf.mxu0
  %v323 = vadd.f32 %v299, %v322
  %324 = vdwg.mxu0
  %325 = vmatpush.msra.mxu0 0.0
  %326 = vmatpush.msra.mxu0 0.0
  %327 = vmatpush.msra.mxu0 0.0
  %328 = vmatpush.msra.mxu0 0.0
  %329 = vmatpush.msra.mxu0 0.0
  %330 = vmatpush.msra.mxu0 0.0
  %331 = vmatpush.msra.mxu0 0.0
  %332 = vmatpush.msra.mxu0 %v290
  %333 = vmatpush.msra.mxu0 %v284
  %334 = vmatpush.msra.mxu0 %v278
  %335 = vmatpush.msra.mxu0 %v272
  %336 = vmatpush.msra.mxu0 %v266
  %337 = vmatpush.msra.mxu0 %v260
  %338 = vmatpush.msra.mxu0 %v254
  %339 = vmatpush.msra.mxu0 %v248
  %340 = vmatpush.msra.mxu0 %v242
  %341 = vmatmul.f32.gmra.mxu0 %v303
  %v342 = vpop.f32.mrf.mxu0
  %v343 = vadd.f32 %v299, %v342
  %344 = vdwg.mxu0
  %345 = vmatpush.msra.mxu0 0.0
  %346 = vmatpush.msra.mxu0 0.0
  %347 = vmatpush.msra.mxu0 0.0
  %348 = vmatpush.msra.mxu0 0.0
  %349 = vmatpush.msra.mxu0 0.0
  %350 = vmatpush.msra.mxu0 0.0
  %351 = vmatpush.msra.mxu0 0.0
  %352 = vmatpush.msra.mxu0 %v291
  %353 = vmatpush.msra.mxu0 %v285
  %354 = vmatpush.msra.mxu0 %v279
  %355 = vmatpush.msra.mxu0 %v273
  %356 = vmatpush.msra.mxu0 %v267
  %357 = vmatpush.msra.mxu0 %v261
  %358 = vmatpush.msra.mxu0 %v255
  %359 = vmatpush.msra.mxu0 %v249
  %360 = vmatpush.msra.mxu0 %v243
  %361 = vmatmul.f32.gmra.mxu0 %v303
  %v362 = vpop.f32.mrf.mxu0
  %v363 = vadd.f32 %v299, %v362
  %364 = vdwg.mxu0
  %365 = vmatpush.msra.mxu0 0.0
  %366 = vmatpush.msra.mxu0 0.0
  %367 = vmatpush.msra.mxu0 0.0
  %368 = vmatpush.msra.mxu0 0.0
  %369 = vmatpush.msra.mxu0 0.0
  %370 = vmatpush.msra.mxu0 0.0
  %371 = vmatpush.msra.mxu0 0.0
  %372 = vmatpush.msra.mxu0 %v292
  %373 = vmatpush.msra.mxu0 %v286
  %374 = vmatpush.msra.mxu0 %v280
  %375 = vmatpush.msra.mxu0 %v274
  %376 = vmatpush.msra.mxu0 %v268
  %377 = vmatpush.msra.mxu0 %v262
  %378 = vmatpush.msra.mxu0 %v256
  %379 = vmatpush.msra.mxu0 %v250
  %380 = vmatpush.msra.mxu0 %v244
  %381 = vmatmul.f32.gmra.mxu0 %v303
  %v382 = vpop.f32.mrf.mxu0
  %v383 = vadd.f32 %v299, %v382
  %384 = vdwg.mxu0
  %385 = vmatpush.msra.mxu0 0.0
  %386 = vmatpush.msra.mxu0 0.0
  %387 = vmatpush.msra.mxu0 0.0
  %388 = vmatpush.msra.mxu0 0.0
  %389 = vmatpush.msra.mxu0 0.0
  %390 = vmatpush.msra.mxu0 0.0
  %391 = vmatpush.msra.mxu0 0.0
  %392 = vmatpush.msra.mxu0 %v293
  %393 = vmatpush.msra.mxu0 %v287
  %394 = vmatpush.msra.mxu0 %v281
  %395 = vmatpush.msra.mxu0 %v275
  %396 = vmatpush.msra.mxu0 %v269
  %397 = vmatpush.msra.mxu0 %v263
  %398 = vmatpush.msra.mxu0 %v257
  %399 = vmatpush.msra.mxu0 %v251
  %400 = vmatpush.msra.mxu0 %v245
  %401 = vmatmul.f32.gmra.mxu0 %v303
  %v402 = vpop.f32.mrf.mxu0
  %v403 = vadd.f32 %v299, %v402
  %404 = vdwg.mxu0
  %405 = vmatpush.msra.mxu0 0.0
  %406 = vmatpush.msra.mxu0 0.0
  %407 = vmatpush.msra.mxu0 0.0
  %408 = vmatpush.msra.mxu0 0.0
  %409 = vmatpush.msra.mxu0 0.0
  %410 = vmatpush.msra.mxu0 0.0
  %411 = vmatpush.msra.mxu0 0.0
  %412 = vmatpush.msra.mxu0 %v294
  %413 = vmatpush.msra.mxu0 %v288
  %414 = vmatpush.msra.mxu0 %v282
  %415 = vmatpush.msra.mxu0 %v276
  %416 = vmatpush.msra.mxu0 %v270
  %417 = vmatpush.msra.mxu0 %v264
  %418 = vmatpush.msra.mxu0 %v258
  %419 = vmatpush.msra.mxu0 %v252
  %420 = vmatpush.msra.mxu0 %v246
  %421 = vmatmul.f32.gmra.mxu0 %v303
  %v422 = vpop.f32.mrf.mxu0
  %v423 = vadd.f32 %v299, %v422
  %424 = vdwg.mxu0
  %v425 = vld [vmem:[%s6] ss:$2 sm:$0x3f]
  %v427 = vperm.slane %v425, 0
  %v428 = vperm.slane %v425, 1
  %v429 = vperm.slane %v425, 2
  %v430 = vperm.slane %v425, 3
  %v431 = vperm.slane %v425, 4
  %v432 = vperm.slane %v425, 5
  %v439 = vmul.f32 %v323, %v427
  %v440 = vmul.f32 %v343, %v428
  %v441 = vmul.f32 %v363, %v429
  %v442 = vmul.f32 %v383, %v430
  %v443 = vmul.f32 %v403, %v431
  %v444 = vmul.f32 %v423, %v432
  %v445 = vadd.f32 %v439, %v440
  %v446 = vadd.f32 %v445, %v441
  %v447 = vadd.f32 %v446, %v442
  %v448 = vadd.f32 %v447, %v443
  %v449 = vadd.f32 %v448, %v444
  %450 = vadd.xlane.f32.xlu0 %v449
  %v451 = vpop.xlane.xlu0 %450
  %v452 = vmul.f32 %v451, 0.00390625
  %v453 = vmul.f32 %v427, %v452
  %v454 = vmul.f32 %v428, %v452
  %v455 = vmul.f32 %v429, %v452
  %v456 = vmul.f32 %v430, %v452
  %v457 = vmul.f32 %v431, %v452
  %v458 = vmul.f32 %v432, %v452
  %v459 = vadd.f32 %v453, 0.0
  %v460 = vadd.f32 %v454, 0.0
  %v461 = vadd.f32 %v455, 0.0
  %v462 = vadd.f32 %v456, 0.0
  %v463 = vadd.f32 %v457, 0.0
  %v464 = vadd.f32 %v458, 0.0
  %s465 = scalar_lea.vmem %s6, 1
  %v466 = vld [vmem:[%s465] ss:$2 sm:$0x3f]
  %v468 = vperm.slane %v466, 0
  %v469 = vperm.slane %v466, 1
  %v470 = vperm.slane %v466, 2
  %v471 = vperm.slane %v466, 3
  %v472 = vperm.slane %v466, 4
  %v473 = vperm.slane %v466, 5
  %v480 = vmul.f32 %v323, %v468
  %v481 = vmul.f32 %v343, %v469
  %v482 = vmul.f32 %v363, %v470
  %v483 = vmul.f32 %v383, %v471
  %v484 = vmul.f32 %v403, %v472
  %v485 = vmul.f32 %v423, %v473
  %v486 = vadd.f32 %v480, %v481
  %v487 = vadd.f32 %v486, %v482
  %v488 = vadd.f32 %v487, %v483
  %v489 = vadd.f32 %v488, %v484
  %v490 = vadd.f32 %v489, %v485
  %491 = vadd.xlane.f32.xlu0 %v490
  %v492 = vpop.xlane.xlu0 %491
  %v493 = vmul.f32 %v492, 0.00390625
  %v494 = vmul.f32 %v468, %v493
  %v495 = vmul.f32 %v469, %v493
  %v496 = vmul.f32 %v470, %v493
  %v497 = vmul.f32 %v471, %v493
  %v498 = vmul.f32 %v472, %v493
  %v499 = vmul.f32 %v473, %v493
  %v500 = vadd.f32 %v459, %v494
  %v501 = vadd.f32 %v460, %v495
  %v502 = vadd.f32 %v461, %v496
  %v503 = vadd.f32 %v462, %v497
  %v504 = vadd.f32 %v463, %v498
  %v505 = vadd.f32 %v464, %v499
  %v506 = vsub.f32 %v323, %v500
  %v507 = vsub.f32 %v343, %v501
  %v508 = vsub.f32 %v363, %v502
  %v509 = vsub.f32 %v383, %v503
  %v510 = vsub.f32 %v403, %v504
  %v511 = vsub.f32 %v423, %v505
  %v512 = vmul.f32 %v506, %v506
  %v513 = vmul.f32 %v507, %v507
  %v514 = vmul.f32 %v508, %v508
  %v515 = vmul.f32 %v509, %v509
  %v516 = vmul.f32 %v510, %v510
  %v517 = vmul.f32 %v511, %v511
  %v518 = vmul.f32 %v512, %v427
  %v519 = vmul.f32 %v513, %v428
  %v520 = vmul.f32 %v514, %v429
  %v521 = vmul.f32 %v515, %v430
  %v522 = vmul.f32 %v516, %v431
  %v523 = vmul.f32 %v517, %v432
  %v524 = vadd.f32 %v518, %v519
  %v525 = vadd.f32 %v524, %v520
  %v526 = vadd.f32 %v525, %v521
  %v527 = vadd.f32 %v526, %v522
  %v528 = vadd.f32 %v527, %v523
  %529 = vadd.xlane.f32.xlu0 %v528
  %v530 = vpop.xlane.xlu0 %529
  %v531 = vmul.f32 %v530, 0.00390625
  %v532 = vmul.f32 %v427, %v531
  %v533 = vmul.f32 %v428, %v531
  %v534 = vmul.f32 %v429, %v531
  %v535 = vmul.f32 %v430, %v531
  %v536 = vmul.f32 %v431, %v531
  %v537 = vmul.f32 %v432, %v531
  %v538 = vadd.f32 %v532, 0.0
  %v539 = vadd.f32 %v533, 0.0
  %v540 = vadd.f32 %v534, 0.0
  %v541 = vadd.f32 %v535, 0.0
  %v542 = vadd.f32 %v536, 0.0
  %v543 = vadd.f32 %v537, 0.0
  %v544 = vmul.f32 %v512, %v468
  %v545 = vmul.f32 %v513, %v469
  %v546 = vmul.f32 %v514, %v470
  %v547 = vmul.f32 %v515, %v471
  %v548 = vmul.f32 %v516, %v472
  %v549 = vmul.f32 %v517, %v473
  %v550 = vadd.f32 %v544, %v545
  %v551 = vadd.f32 %v550, %v546
  %v552 = vadd.f32 %v551, %v547
  %v553 = vadd.f32 %v552, %v548
  %v554 = vadd.f32 %v553, %v549
  %555 = vadd.xlane.f32.xlu0 %v554
  %v556 = vpop.xlane.xlu0 %555
  %v557 = vmul.f32 %v556, 0.00390625
  %v558 = vmul.f32 %v468, %v557
  %v559 = vmul.f32 %v469, %v557
  %v560 = vmul.f32 %v470, %v557
  %v561 = vmul.f32 %v471, %v557
  %v562 = vmul.f32 %v472, %v557
  %v563 = vmul.f32 %v473, %v557
  %v564 = vadd.f32 %v538, %v558
  %v565 = vadd.f32 %v539, %v559
  %v566 = vadd.f32 %v540, %v560
  %v567 = vadd.f32 %v541, %v561
  %v568 = vadd.f32 %v542, %v562
  %v569 = vadd.f32 %v543, %v563
  %v570 = vadd.f32 %v564, 1e-05
  %v571 = vadd.f32 %v565, 1e-05
  %v572 = vadd.f32 %v566, 1e-05
  %v573 = vadd.f32 %v567, 1e-05
  %v574 = vadd.f32 %v568, 1e-05
  %v575 = vadd.f32 %v569, 1e-05
  %v576 = vrsqrt.pop %v570
  %v577 = vmul.f32 %v576, %v570
  %v578 = vmul.f32 %v577, %v576
  %v579 = vmul.f32 0.5, %v578
  %v580 = vsub.f32 1.5, %v579
  %v581 = vmul.f32 %v576, %v580
  %vm582 = vweird.f32 %v570
  %vm583 = vweird.f32 %v576
  %vm584 = vmor %vm582, %vm583
  %v585 = vsel %vm584, %v576, %v581
  %v586 = vrsqrt.pop %v571
  %v587 = vmul.f32 %v586, %v571
  %v588 = vmul.f32 %v587, %v586
  %v589 = vmul.f32 0.5, %v588
  %v590 = vsub.f32 1.5, %v589
  %v591 = vmul.f32 %v586, %v590
  %vm592 = vweird.f32 %v571
  %vm593 = vweird.f32 %v586
  %vm594 = vmor %vm592, %vm593
  %v595 = vsel %vm594, %v586, %v591
  %v596 = vrsqrt.pop %v572
  %v597 = vmul.f32 %v596, %v572
  %v598 = vmul.f32 %v597, %v596
  %v599 = vmul.f32 0.5, %v598
  %v600 = vsub.f32 1.5, %v599
  %v601 = vmul.f32 %v596, %v600
  %vm602 = vweird.f32 %v572
  %vm603 = vweird.f32 %v596
  %vm604 = vmor %vm602, %vm603
  %v605 = vsel %vm604, %v596, %v601
  %v606 = vrsqrt.pop %v573
  %v607 = vmul.f32 %v606, %v573
  %v608 = vmul.f32 %v607, %v606
  %v609 = vmul.f32 0.5, %v608
  %v610 = vsub.f32 1.5, %v609
  %v611 = vmul.f32 %v606, %v610
  %vm612 = vweird.f32 %v573
  %vm613 = vweird.f32 %v606
  %vm614 = vmor %vm612, %vm613
  %v615 = vsel %vm614, %v606, %v611
  %v616 = vrsqrt.pop %v574
  %v617 = vmul.f32 %v616, %v574
  %v618 = vmul.f32 %v617, %v616
  %v619 = vmul.f32 0.5, %v618
  %v620 = vsub.f32 1.5, %v619
  %v621 = vmul.f32 %v616, %v620
  %vm622 = vweird.f32 %v574
  %vm623 = vweird.f32 %v616
  %vm624 = vmor %vm622, %vm623
  %v625 = vsel %vm624, %v616, %v621
  %v626 = vrsqrt.pop %v575
  %v627 = vmul.f32 %v626, %v575
  %v628 = vmul.f32 %v627, %v626
  %v629 = vmul.f32 0.5, %v628
  %v630 = vsub.f32 1.5, %v629
  %v631 = vmul.f32 %v626, %v630
  %vm632 = vweird.f32 %v575
  %vm633 = vweird.f32 %v626
  %vm634 = vmor %vm632, %vm633
  %v635 = vsel %vm634, %v626, %v631
  %v636 = vmul.f32 %v506, %v585
  %v637 = vmul.f32 %v507, %v595
  %v638 = vmul.f32 %v508, %v605
  %v639 = vmul.f32 %v509, %v615
  %v640 = vmul.f32 %v510, %v625
  %v641 = vmul.f32 %v511, %v635
  %v642 = vmax.f32 %v636, 0.0
  %v643 = vmax.f32 %v637, 0.0
  %v644 = vmax.f32 %v638, 0.0
  %v645 = vmax.f32 %v639, 0.0
  %v646 = vmax.f32 %v640, 0.0
  %v647 = vmax.f32 %v641, 0.0
  %v648 = vld [vmem:[%s5] ss:$8 sm:$0xf]
  %v649 = vld [vmem:[%s5] ss:$8 sm:$0x30]
  %v650 = vor.u32 %v648, %v649
  %651 = vrot.lane.b32.xlu0 %v642, 127
  %v652 = vpop.permute.xlu0 %651
  %653 = vrot.lane.b32.xlu0 %v643, 127
  %v654 = vpop.permute.xlu0 %653
  %655 = vrot.lane.b32.xlu0 %v644, 127
  %v656 = vpop.permute.xlu0 %655
  %657 = vrot.lane.b32.xlu0 %v645, 127
  %v658 = vpop.permute.xlu0 %657
  %659 = vrot.lane.b32.xlu0 %v646, 127
  %v660 = vpop.permute.xlu0 %659
  %661 = vrot.lane.b32.xlu0 %v647, 127
  %v662 = vpop.permute.xlu0 %661
  %v663 = vsel %vm52, %v660, %v662
  %v664 = vsel %vm52, %v658, %v660
  %v665 = vsel %vm52, %v656, %v658
  %v666 = vsel %vm52, %v654, %v656
  %v667 = vsel %vm52, %v652, %v654
  %v668 = vsel %vm52, %v662, %v652
  %v670 = vperm.slane %v650, 0
  %v671 = vperm.slane %v650, 1
  %v672 = vperm.slane %v650, 2
  %v673 = vperm.slane %v650, 3
  %v674 = vperm.slane %v650, 4
  %v675 = vperm.slane %v650, 5
  %v682 = vmul.f32 %v670, %v667
  %v683 = vmul.f32 %v671, %v666
  %v684 = vmul.f32 %v672, %v665
  %v685 = vmul.f32 %v673, %v664
  %v686 = vmul.f32 %v674, %v663
  %v687 = vmul.f32 %v675, %v668
  %s688 = scalar_lea.vmem %s5, 1
  %v689 = vld [vmem:[%s688] ss:$8 sm:$0xf]
  %v690 = vld [vmem:[%s688] ss:$8 sm:$0x30]
  %v691 = vor.u32 %v689, %v690
  %692 = vrot.lane.b32.xlu0 %v642, 1
  %v693 = vpop.permute.xlu0 %692
  %694 = vrot.lane.b32.xlu0 %v643, 1
  %v695 = vpop.permute.xlu0 %694
  %696 = vrot.lane.b32.xlu0 %v644, 1
  %v697 = vpop.permute.xlu0 %696
  %698 = vrot.lane.b32.xlu0 %v645, 1
  %v699 = vpop.permute.xlu0 %698
  %700 = vrot.lane.b32.xlu0 %v646, 1
  %v701 = vpop.permute.xlu0 %700
  %702 = vrot.lane.b32.xlu0 %v647, 1
  %v703 = vpop.permute.xlu0 %702
  %vm704 = vcmp.lt.s32.totalorder %v51, 1
  %v705 = vsel %vm704, %v701, %v703
  %v706 = vsel %vm704, %v699, %v701
  %v707 = vsel %vm704, %v697, %v699
  %v708 = vsel %vm704, %v695, %v697
  %v709 = vsel %vm704, %v693, %v695
  %v710 = vsel %vm704, %v703, %v693
  %v712 = vperm.slane %v691, 0
  %v713 = vperm.slane %v691, 1
  %v714 = vperm.slane %v691, 2
  %v715 = vperm.slane %v691, 3
  %v716 = vperm.slane %v691, 4
  %v717 = vperm.slane %v691, 5
  %v724 = vmul.f32 %v712, %v710
  %v725 = vmul.f32 %v713, %v709
  %v726 = vmul.f32 %v714, %v708
  %v727 = vmul.f32 %v715, %v707
  %v728 = vmul.f32 %v716, %v706
  %v729 = vmul.f32 %v717, %v705
  %v730 = vadd.f32 %v682, %v724
  %v731 = vadd.f32 %v683, %v725
  %v732 = vadd.f32 %v684, %v726
  %v733 = vadd.f32 %v685, %v727
  %v734 = vadd.f32 %v686, %v728
  %v735 = vadd.f32 %v687, %v729
  %s736 = scalar_lea.vmem %s5, 2
  %v737 = vld [vmem:[%s736] ss:$8 sm:$0xf]
  %v738 = vld [vmem:[%s736] ss:$8 sm:$0x30]
  %v739 = vor.u32 %v737, %v738
  %740 = vrot.lane.b32.xlu0 %v642, 3
  %v741 = vpop.permute.xlu0 %740
  %742 = vrot.lane.b32.xlu0 %v643, 3
  %v743 = vpop.permute.xlu0 %742
  %744 = vrot.lane.b32.xlu0 %v644, 3
  %v745 = vpop.permute.xlu0 %744
  %746 = vrot.lane.b32.xlu0 %v645, 3
  %v747 = vpop.permute.xlu0 %746
  %748 = vrot.lane.b32.xlu0 %v646, 3
  %v749 = vpop.permute.xlu0 %748
  %750 = vrot.lane.b32.xlu0 %v647, 3
  %v751 = vpop.permute.xlu0 %750
  %vm752 = vcmp.lt.s32.totalorder %v51, 3
  %v753 = vsel %vm752, %v749, %v751
  %v754 = vsel %vm752, %v747, %v749
  %v755 = vsel %vm752, %v745, %v747
  %v756 = vsel %vm752, %v743, %v745
  %v757 = vsel %vm752, %v741, %v743
  %v758 = vsel %vm752, %v751, %v741
  %v760 = vperm.slane %v739, 0
  %v761 = vperm.slane %v739, 1
  %v762 = vperm.slane %v739, 2
  %v763 = vperm.slane %v739, 3
  %v764 = vperm.slane %v739, 4
  %v765 = vperm.slane %v739, 5
  %v772 = vmul.f32 %v760, %v758
  %v773 = vmul.f32 %v761, %v757
  %v774 = vmul.f32 %v762, %v756
  %v775 = vmul.f32 %v763, %v755
  %v776 = vmul.f32 %v764, %v754
  %v777 = vmul.f32 %v765, %v753
  %v778 = vadd.f32 %v730, %v772
  %v779 = vadd.f32 %v731, %v773
  %v780 = vadd.f32 %v732, %v774
  %v781 = vadd.f32 %v733, %v775
  %v782 = vadd.f32 %v734, %v776
  %v783 = vadd.f32 %v735, %v777
  %s784 = scalar_lea.vmem %s5, 3
  %v785 = vld [vmem:[%s784] ss:$8 sm:$0xf]
  %v786 = vld [vmem:[%s784] ss:$8 sm:$0x30]
  %v787 = vor.u32 %v785, %v786
  %788 = vrot.lane.b32.xlu0 %v778, 110
  %v789 = vpop.permute.xlu0 %788
  %790 = vrot.lane.b32.xlu0 %v779, 110
  %v791 = vpop.permute.xlu0 %790
  %792 = vrot.lane.b32.xlu0 %v780, 110
  %v793 = vpop.permute.xlu0 %792
  %794 = vrot.lane.b32.xlu0 %v781, 110
  %v795 = vpop.permute.xlu0 %794
  %796 = vrot.lane.b32.xlu0 %v782, 110
  %v797 = vpop.permute.xlu0 %796
  %798 = vrot.lane.b32.xlu0 %v783, 110
  %v799 = vpop.permute.xlu0 %798
  %v800 = vsel %vm102, %v797, %v799
  %v801 = vsel %vm102, %v795, %v797
  %v802 = vsel %vm102, %v793, %v795
  %v803 = vsel %vm102, %v791, %v793
  %v804 = vsel %vm102, %v789, %v791
  %v805 = vsel %vm102, %v799, %v789
  %v807 = vperm.slane %v787, 0
  %v808 = vperm.slane %v787, 1
  %v809 = vperm.slane %v787, 2
  %v810 = vperm.slane %v787, 3
  %v811 = vperm.slane %v787, 4
  %v812 = vperm.slane %v787, 5
  %v819 = vmul.f32 %v807, %v804
  %v820 = vmul.f32 %v808, %v803
  %v821 = vmul.f32 %v809, %v802
  %v822 = vmul.f32 %v810, %v801
  %v823 = vmul.f32 %v811, %v800
  %v824 = vmul.f32 %v812, %v805
  %s825 = scalar_lea.vmem %s5, 4
  %v826 = vld [vmem:[%s825] ss:$8 sm:$0xf]
  %v827 = vld [vmem:[%s825] ss:$8 sm:$0x30]
  %v828 = vor.u32 %v826, %v827
  %829 = vrot.lane.b32.xlu0 %v778, 18
  %v830 = vpop.permute.xlu0 %829
  %831 = vrot.lane.b32.xlu0 %v779, 18
  %v832 = vpop.permute.xlu0 %831
  %833 = vrot.lane.b32.xlu0 %v780, 18
  %v834 = vpop.permute.xlu0 %833
  %835 = vrot.lane.b32.xlu0 %v781, 18
  %v836 = vpop.permute.xlu0 %835
  %837 = vrot.lane.b32.xlu0 %v782, 18
  %v838 = vpop.permute.xlu0 %837
  %839 = vrot.lane.b32.xlu0 %v783, 18
  %v840 = vpop.permute.xlu0 %839
  %vm841 = vcmp.lt.s32.totalorder %v51, 18
  %v842 = vsel %vm841, %v838, %v840
  %v843 = vsel %vm841, %v836, %v838
  %v844 = vsel %vm841, %v834, %v836
  %v845 = vsel %vm841, %v832, %v834
  %v846 = vsel %vm841, %v830, %v832
  %v847 = vsel %vm841, %v840, %v830
  %v849 = vperm.slane %v828, 0
  %v850 = vperm.slane %v828, 1
  %v851 = vperm.slane %v828, 2
  %v852 = vperm.slane %v828, 3
  %v853 = vperm.slane %v828, 4
  %v854 = vperm.slane %v828, 5
  %v861 = vmul.f32 %v849, %v847
  %v862 = vmul.f32 %v850, %v846
  %v863 = vmul.f32 %v851, %v845
  %v864 = vmul.f32 %v852, %v844
  %v865 = vmul.f32 %v853, %v843
  %v866 = vmul.f32 %v854, %v842
  %v867 = vadd.f32 %v819, %v861
  %v868 = vadd.f32 %v820, %v862
  %v869 = vadd.f32 %v821, %v863
  %v870 = vadd.f32 %v822, %v864
  %v871 = vadd.f32 %v823, %v865
  %v872 = vadd.f32 %v824, %v866
  %s873 = scalar_lea.vmem %s5, 5
  %v874 = vld [vmem:[%s873] ss:$8 sm:$0xf]
  %v875 = vld [vmem:[%s873] ss:$8 sm:$0x30]
  %v876 = vor.u32 %v874, %v875
  %877 = vrot.lane.b32.xlu0 %v778, 54
  %v878 = vpop.permute.xlu0 %877
  %879 = vrot.lane.b32.xlu0 %v779, 54
  %v880 = vpop.permute.xlu0 %879
  %881 = vrot.lane.b32.xlu0 %v780, 54
  %v882 = vpop.permute.xlu0 %881
  %883 = vrot.lane.b32.xlu0 %v781, 54
  %v884 = vpop.permute.xlu0 %883
  %885 = vrot.lane.b32.xlu0 %v782, 54
  %v886 = vpop.permute.xlu0 %885
  %887 = vrot.lane.b32.xlu0 %v783, 54
  %v888 = vpop.permute.xlu0 %887
  %vm889 = vcmp.lt.s32.totalorder %v51, 54
  %v890 = vsel %vm889, %v886, %v888
  %v891 = vsel %vm889, %v884, %v886
  %v892 = vsel %vm889, %v882, %v884
  %v893 = vsel %vm889, %v880, %v882
  %v894 = vsel %vm889, %v878, %v880
  %v895 = vsel %vm889, %v888, %v878
  %v897 = vperm.slane %v876, 0
  %v898 = vperm.slane %v876, 1
  %v899 = vperm.slane %v876, 2
  %v900 = vperm.slane %v876, 3
  %v901 = vperm.slane %v876, 4
  %v902 = vperm.slane %v876, 5
  %v909 = vmul.f32 %v897, %v895
  %v910 = vmul.f32 %v898, %v894
  %v911 = vmul.f32 %v899, %v893
  %v912 = vmul.f32 %v900, %v892
  %v913 = vmul.f32 %v901, %v891
  %v914 = vmul.f32 %v902, %v890
  %v915 = vadd.f32 %v867, %v909
  %v916 = vadd.f32 %v868, %v910
  %v917 = vadd.f32 %v869, %v911
  %v918 = vadd.f32 %v870, %v912
  %v919 = vadd.f32 %v871, %v913
  %v920 = vadd.f32 %v872, %v914
  %921 = vst [vmem:[#allocation2] sm:$0xff] %v915
  %922 = vst [vmem:[#allocation2 + $0x8] sm:$0xff] %v916
  %923 = vst [vmem:[#allocation2 + $0x10] sm:$0xff] %v917
  %924 = vst [vmem:[#allocation2 + $0x18] sm:$0xff] %v918
  %925 = vst [vmem:[#allocation2 + $0x20] sm:$0xff] %v919
  %926 = vst [vmem:[#allocation2 + $0x28] sm:$0xff] %v920
  %927 = vrot.lane.b32.xlu0 %v915, 127
  %v928 = vpop.permute.xlu0 %927
  %929 = vrot.lane.b32.xlu0 %v916, 127
  %v930 = vpop.permute.xlu0 %929
  %931 = vrot.lane.b32.xlu0 %v917, 127
  %v932 = vpop.permute.xlu0 %931
  %933 = vrot.lane.b32.xlu0 %v918, 127
  %v934 = vpop.permute.xlu0 %933
  %935 = vrot.lane.b32.xlu0 %v919, 127
  %v936 = vpop.permute.xlu0 %935
  %937 = vrot.lane.b32.xlu0 %v920, 127
  %v938 = vpop.permute.xlu0 %937
  %v939 = vsel %vm52, %v936, %v938
  %v940 = vsel %vm52, %v934, %v936
  %v941 = vsel %vm52, %v932, %v934
  %v942 = vsel %vm52, %v930, %v932
  %v943 = vsel %vm52, %v928, %v930
  %v944 = vsel %vm52, %v938, %v928
  %945 = vst [vmem:[#allocation2 + $0x30] sm:$0xff] %v943
  %946 = vst [vmem:[#allocation2 + $0x38] sm:$0xff] %v942
  %947 = vst [vmem:[#allocation2 + $0x40] sm:$0xff] %v941
  %948 = vst [vmem:[#allocation2 + $0x48] sm:$0xff] %v940
  %949 = vst [vmem:[#allocation2 + $0x50] sm:$0xff] %v939
  %950 = vst [vmem:[#allocation2 + $0x58] sm:$0xff] %v944
  %951 = vrot.lane.b32.xlu0 %v915, 126
  %v952 = vpop.permute.xlu0 %951
  %953 = vrot.lane.b32.xlu0 %v916, 126
  %v954 = vpop.permute.xlu0 %953
  %955 = vrot.lane.b32.xlu0 %v917, 126
  %v956 = vpop.permute.xlu0 %955
  %957 = vrot.lane.b32.xlu0 %v918, 126
  %v958 = vpop.permute.xlu0 %957
  %959 = vrot.lane.b32.xlu0 %v919, 126
  %v960 = vpop.permute.xlu0 %959
  %961 = vrot.lane.b32.xlu0 %v920, 126
  %v962 = vpop.permute.xlu0 %961
  %v963 = vsel %vm77, %v960, %v962
  %v964 = vsel %vm77, %v958, %v960
  %v965 = vsel %vm77, %v956, %v958
  %v966 = vsel %vm77, %v954, %v956
  %v967 = vsel %vm77, %v952, %v954
  %v968 = vsel %vm77, %v962, %v952
  %969 = vst [vmem:[#allocation2 + $0x60] sm:$0xff] %v967
  %970 = vst [vmem:[#allocation2 + $0x68] sm:$0xff] %v966
  %971 = vst [vmem:[#allocation2 + $0x70] sm:$0xff] %v965
  %972 = vst [vmem:[#allocation2 + $0x78] sm:$0xff] %v964
  %973 = vst [vmem:[#allocation2 + $0x80] sm:$0xff] %v963
  %974 = vst [vmem:[#allocation2 + $0x88] sm:$0xff] %v968
  %975 = vrot.lane.b32.xlu0 %v915, 110
  %v976 = vpop.permute.xlu0 %975
  %977 = vrot.lane.b32.xlu0 %v916, 110
  %v978 = vpop.permute.xlu0 %977
  %979 = vrot.lane.b32.xlu0 %v917, 110
  %v980 = vpop.permute.xlu0 %979
  %981 = vrot.lane.b32.xlu0 %v918, 110
  %v982 = vpop.permute.xlu0 %981
  %983 = vrot.lane.b32.xlu0 %v919, 110
  %v984 = vpop.permute.xlu0 %983
  %985 = vrot.lane.b32.xlu0 %v920, 110
  %v986 = vpop.permute.xlu0 %985
  %v987 = vsel %vm102, %v984, %v986
  %v988 = vsel %vm102, %v982, %v984
  %v989 = vsel %vm102, %v980, %v982
  %v990 = vsel %vm102, %v978, %v980
  %v991 = vsel %vm102, %v976, %v978
  %v992 = vsel %vm102, %v986, %v976
  %993 = vst [vmem:[#allocation2 + $0x90] sm:$0xff] %v991
  %994 = vst [vmem:[#allocation2 + $0x98] sm:$0xff] %v990
  %995 = vst [vmem:[#allocation2 + $0xa0] sm:$0xff] %v989
  %996 = vst [vmem:[#allocation2 + $0xa8] sm:$0xff] %v988
  %997 = vst [vmem:[#allocation2 + $0xb0] sm:$0xff] %v987
  %998 = vst [vmem:[#allocation2 + $0xb8] sm:$0xff] %v992
  %999 = vrot.lane.b32.xlu0 %v915, 109
  %v1000 = vpop.permute.xlu0 %999
  %1001 = vrot.lane.b32.xlu0 %v916, 109
  %v1002 = vpop.permute.xlu0 %1001
  %1003 = vrot.lane.b32.xlu0 %v917, 109
  %v1004 = vpop.permute.xlu0 %1003
  %1005 = vrot.lane.b32.xlu0 %v918, 109
  %v1006 = vpop.permute.xlu0 %1005
  %1007 = vrot.lane.b32.xlu0 %v919, 109
  %v1008 = vpop.permute.xlu0 %1007
  %1009 = vrot.lane.b32.xlu0 %v920, 109
  %v1010 = vpop.permute.xlu0 %1009
  %v1011 = vsel %vm127, %v1008, %v1010
  %v1012 = vsel %vm127, %v1006, %v1008
  %v1013 = vsel %vm127, %v1004, %v1006
  %v1014 = vsel %vm127, %v1002, %v1004
  %v1015 = vsel %vm127, %v1000, %v1002
  %v1016 = vsel %vm127, %v1010, %v1000
  %1017 = vst [vmem:[#allocation2 + $0xc0] sm:$0xff] %v1015
  %1018 = vst [vmem:[#allocation2 + $0xc8] sm:$0xff] %v1014
  %1019 = vst [vmem:[#allocation2 + $0xd0] sm:$0xff] %v1013
  %1020 = vst [vmem:[#allocation2 + $0xd8] sm:$0xff] %v1012
  %1021 = vst [vmem:[#allocation2 + $0xe0] sm:$0xff] %v1011
  %1022 = vst [vmem:[#allocation2 + $0xe8] sm:$0xff] %v1016
  %1023 = vrot.lane.b32.xlu0 %v915, 108
  %v1024 = vpop.permute.xlu0 %1023
  %1025 = vrot.lane.b32.xlu0 %v916, 108
  %v1026 = vpop.permute.xlu0 %1025
  %1027 = vrot.lane.b32.xlu0 %v917, 108
  %v1028 = vpop.permute.xlu0 %1027
  %1029 = vrot.lane.b32.xlu0 %v918, 108
  %v1030 = vpop.permute.xlu0 %1029
  %1031 = vrot.lane.b32.xlu0 %v919, 108
  %v1032 = vpop.permute.xlu0 %1031
  %1033 = vrot.lane.b32.xlu0 %v920, 108
  %v1034 = vpop.permute.xlu0 %1033
  %v1035 = vsel %vm152, %v1032, %v1034
  %v1036 = vsel %vm152, %v1030, %v1032
  %v1037 = vsel %vm152, %v1028, %v1030
  %v1038 = vsel %vm152, %v1026, %v1028
  %v1039 = vsel %vm152, %v1024, %v1026
  %v1040 = vsel %vm152, %v1034, %v1024
  %1041 = vst [vmem:[#allocation2 + $0xf0] sm:$0xff] %v1039
  %1042 = vst [vmem:[#allocation2 + $0xf8] sm:$0xff] %v1038
  %1043 = vst [vmem:[#allocation2 + $0x100] sm:$0xff] %v1037
  %1044 = vst [vmem:[#allocation2 + $0x108] sm:$0xff] %v1036
  %1045 = vst [vmem:[#allocation2 + $0x110] sm:$0xff] %v1035
  %1046 = vst [vmem:[#allocation2 + $0x118] sm:$0xff] %v1040
  %1047 = vrot.lane.b32.xlu0 %v915, 92
  %v1048 = vpop.permute.xlu0 %1047
  %1049 = vrot.lane.b32.xlu0 %v916, 92
  %v1050 = vpop.permute.xlu0 %1049
  %1051 = vrot.lane.b32.xlu0 %v917, 92
  %v1052 = vpop.permute.xlu0 %1051
  %1053 = vrot.lane.b32.xlu0 %v918, 92
  %v1054 = vpop.permute.xlu0 %1053
  %1055 = vrot.lane.b32.xlu0 %v919, 92
  %v1056 = vpop.permute.xlu0 %1055
  %1057 = vrot.lane.b32.xlu0 %v920, 92
  %v1058 = vpop.permute.xlu0 %1057
  %v1059 = vsel %vm177, %v1056, %v1058
  %v1060 = vsel %vm177, %v1054, %v1056
  %v1061 = vsel %vm177, %v1052, %v1054
  %v1062 = vsel %vm177, %v1050, %v1052
  %v1063 = vsel %vm177, %v1048, %v1050
  %v1064 = vsel %vm177, %v1058, %v1048
  %1065 = vst [vmem:[#allocation2 + $0x120] sm:$0xff] %v1063
  %1066 = vst [vmem:[#allocation2 + $0x128] sm:$0xff] %v1062
  %1067 = vst [vmem:[#allocation2 + $0x130] sm:$0xff] %v1061
  %1068 = vst [vmem:[#allocation2 + $0x138] sm:$0xff] %v1060
  %1069 = vst [vmem:[#allocation2 + $0x140] sm:$0xff] %v1059
  %1070 = vst [vmem:[#allocation2 + $0x148] sm:$0xff] %v1064
  %1071 = vrot.lane.b32.xlu0 %v915, 91
  %v1072 = vpop.permute.xlu0 %1071
  %1073 = vrot.lane.b32.xlu0 %v916, 91
  %v1074 = vpop.permute.xlu0 %1073
  %1075 = vrot.lane.b32.xlu0 %v917, 91
  %v1076 = vpop.permute.xlu0 %1075
  %1077 = vrot.lane.b32.xlu0 %v918, 91
  %v1078 = vpop.permute.xlu0 %1077
  %1079 = vrot.lane.b32.xlu0 %v919, 91
  %v1080 = vpop.permute.xlu0 %1079
  %1081 = vrot.lane.b32.xlu0 %v920, 91
  %v1082 = vpop.permute.xlu0 %1081
  %v1083 = vsel %vm202, %v1080, %v1082
  %v1084 = vsel %vm202, %v1078, %v1080
  %v1085 = vsel %vm202, %v1076, %v1078
  %v1086 = vsel %vm202, %v1074, %v1076
  %v1087 = vsel %vm202, %v1072, %v1074
  %v1088 = vsel %vm202, %v1082, %v1072
  %1089 = vst [vmem:[#allocation2 + $0x150] sm:$0xff] %v1087
  %1090 = vst [vmem:[#allocation2 + $0x158] sm:$0xff] %v1086
  %1091 = vst [vmem:[#allocation2 + $0x160] sm:$0xff] %v1085
  %1092 = vst [vmem:[#allocation2 + $0x168] sm:$0xff] %v1084
  %1093 = vst [vmem:[#allocation2 + $0x170] sm:$0xff] %v1083
  %1094 = vst [vmem:[#allocation2 + $0x178] sm:$0xff] %v1088
  %1095 = vrot.lane.b32.xlu0 %v915, 90
  %v1096 = vpop.permute.xlu0 %1095
  %1097 = vrot.lane.b32.xlu0 %v916, 90
  %v1098 = vpop.permute.xlu0 %1097
  %1099 = vrot.lane.b32.xlu0 %v917, 90
  %v1100 = vpop.permute.xlu0 %1099
  %1101 = vrot.lane.b32.xlu0 %v918, 90
  %v1102 = vpop.permute.xlu0 %1101
  %1103 = vrot.lane.b32.xlu0 %v919, 90
  %v1104 = vpop.permute.xlu0 %1103
  %1105 = vrot.lane.b32.xlu0 %v920, 90
  %v1106 = vpop.permute.xlu0 %1105
  %v1107 = vsel %vm227, %v1104, %v1106
  %v1108 = vsel %vm227, %v1102, %v1104
  %v1109 = vsel %vm227, %v1100, %v1102
  %v1110 = vsel %vm227, %v1098, %v1100
  %v1111 = vsel %vm227, %v1096, %v1098
  %v1112 = vsel %vm227, %v1106, %v1096
  %1113 = vst [vmem:[#allocation2 + $0x180] sm:$0xff] %v1111
  %1114 = vst [vmem:[#allocation2 + $0x188] sm:$0xff] %v1110
  %1115 = vst [vmem:[#allocation2 + $0x190] sm:$0xff] %v1109
  %1116 = vst [vmem:[#allocation2 + $0x198] sm:$0xff] %v1108
  %1117 = vst [vmem:[#allocation2 + $0x1a0] sm:$0xff] %v1107
  %1118 = vst [vmem:[#allocation2 + $0x1a8] sm:$0xff] %v1112
  %v1119 = vld [vmem:[%s3] sm:$0xff]
  %v1120 = vld [vmem:[#allocation2] sm:$0xff]
  %v1121 = vld [vmem:[#allocation2 + $0x8] sm:$0xff]
  %v1122 = vld [vmem:[#allocation2 + $0x10] sm:$0xff]
  %v1123 = vld [vmem:[#allocation2 + $0x18] sm:$0xff]
  %v1124 = vld [vmem:[#allocation2 + $0x20] sm:$0xff]
  %v1125 = vld [vmem:[#allocation2 + $0x28] sm:$0xff]
  %v1126 = vld [vmem:[#allocation2 + $0x30] sm:$0xff]
  %v1127 = vld [vmem:[#allocation2 + $0x38] sm:$0xff]
  %v1128 = vld [vmem:[#allocation2 + $0x40] sm:$0xff]
  %v1129 = vld [vmem:[#allocation2 + $0x48] sm:$0xff]
  %v1130 = vld [vmem:[#allocation2 + $0x50] sm:$0xff]
  %v1131 = vld [vmem:[#allocation2 + $0x58] sm:$0xff]
  %v1132 = vld [vmem:[#allocation2 + $0x60] sm:$0xff]
  %v1133 = vld [vmem:[#allocation2 + $0x68] sm:$0xff]
  %v1134 = vld [vmem:[#allocation2 + $0x70] sm:$0xff]
  %v1135 = vld [vmem:[#allocation2 + $0x78] sm:$0xff]
  %v1136 = vld [vmem:[#allocation2 + $0x80] sm:$0xff]
  %v1137 = vld [vmem:[#allocation2 + $0x88] sm:$0xff]
  %v1138 = vld [vmem:[#allocation2 + $0x90] sm:$0xff]
  %v1139 = vld [vmem:[#allocation2 + $0x98] sm:$0xff]
  %v1140 = vld [vmem:[#allocation2 + $0xa0] sm:$0xff]
  %v1141 = vld [vmem:[#allocation2 + $0xa8] sm:$0xff]
  %v1142 = vld [vmem:[#allocation2 + $0xb0] sm:$0xff]
  %v1143 = vld [vmem:[#allocation2 + $0xb8] sm:$0xff]
  %v1144 = vld [vmem:[#allocation2 + $0xc0] sm:$0xff]
  %v1145 = vld [vmem:[#allocation2 + $0xc8] sm:$0xff]
  %v1146 = vld [vmem:[#allocation2 + $0xd0] sm:$0xff]
  %v1147 = vld [vmem:[#allocation2 + $0xd8] sm:$0xff]
  %v1148 = vld [vmem:[#allocation2 + $0xe0] sm:$0xff]
  %v1149 = vld [vmem:[#allocation2 + $0xe8] sm:$0xff]
  %v1150 = vld [vmem:[#allocation2 + $0xf0] sm:$0xff]
  %v1151 = vld [vmem:[#allocation2 + $0xf8] sm:$0xff]
  %v1152 = vld [vmem:[#allocation2 + $0x100] sm:$0xff]
  %v1153 = vld [vmem:[#allocation2 + $0x108] sm:$0xff]
  %v1154 = vld [vmem:[#allocation2 + $0x110] sm:$0xff]
  %v1155 = vld [vmem:[#allocation2 + $0x118] sm:$0xff]
  %v1156 = vld [vmem:[#allocation2 + $0x120] sm:$0xff]
  %v1157 = vld [vmem:[#allocation2 + $0x128] sm:$0xff]
  %v1158 = vld [vmem:[#allocation2 + $0x130] sm:$0xff]
  %v1159 = vld [vmem:[#allocation2 + $0x138] sm:$0xff]
  %v1160 = vld [vmem:[#allocation2 + $0x140] sm:$0xff]
  %v1161 = vld [vmem:[#allocation2 + $0x148] sm:$0xff]
  %v1162 = vld [vmem:[#allocation2 + $0x150] sm:$0xff]
  %v1163 = vld [vmem:[#allocation2 + $0x158] sm:$0xff]
  %v1164 = vld [vmem:[#allocation2 + $0x160] sm:$0xff]
  %v1165 = vld [vmem:[#allocation2 + $0x168] sm:$0xff]
  %v1166 = vld [vmem:[#allocation2 + $0x170] sm:$0xff]
  %v1167 = vld [vmem:[#allocation2 + $0x178] sm:$0xff]
  %v1168 = vld [vmem:[#allocation2 + $0x180] sm:$0xff]
  %v1169 = vld [vmem:[#allocation2 + $0x188] sm:$0xff]
  %v1170 = vld [vmem:[#allocation2 + $0x190] sm:$0xff]
  %v1171 = vld [vmem:[#allocation2 + $0x198] sm:$0xff]
  %v1172 = vld [vmem:[#allocation2 + $0x1a0] sm:$0xff]
  %v1173 = vld [vmem:[#allocation2 + $0x1a8] sm:$0xff]
  %v1174 = vld [vmem:[%s4] sm:$0xff]
  %1176 = vset.pattern.permute.xlu0 0
  %1177 = vperm.xlu0 %1176, %v1174
  %v1178 = vpop.permute.xlu0 %1177
  %v1181 = vsel %vm301, %v1119, 0
  %1183 = vmatpush.msra.mxu0 0.0
  %1184 = vmatpush.msra.mxu0 0.0
  %1185 = vmatpush.msra.mxu0 0.0
  %1186 = vmatpush.msra.mxu0 0.0
  %1187 = vmatpush.msra.mxu0 0.0
  %1188 = vmatpush.msra.mxu0 0.0
  %1189 = vmatpush.msra.mxu0 0.0
  %1190 = vmatpush.msra.mxu0 %v1168
  %1191 = vmatpush.msra.mxu0 %v1162
  %1192 = vmatpush.msra.mxu0 %v1156
  %1193 = vmatpush.msra.mxu0 %v1150
  %1194 = vmatpush.msra.mxu0 %v1144
  %1195 = vmatpush.msra.mxu0 %v1138
  %1196 = vmatpush.msra.mxu0 %v1132
  %1197 = vmatpush.msra.mxu0 %v1126
  %1198 = vmatpush.msra.mxu0 %v1120
  %1199 = vmatmul.f32.gmra.mxu0 %v1181
  %v1200 = vpop.f32.mrf.mxu0
  %v1201 = vadd.f32 %v1178, %v1200
  %1202 = vdwg.mxu0
  %1203 = vmatpush.msra.mxu0 0.0
  %1204 = vmatpush.msra.mxu0 0.0
  %1205 = vmatpush.msra.mxu0 0.0
  %1206 = vmatpush.msra.mxu0 0.0
  %1207 = vmatpush.msra.mxu0 0.0
  %1208 = vmatpush.msra.mxu0 0.0
  %1209 = vmatpush.msra.mxu0 0.0
  %1210 = vmatpush.msra.mxu0 %v1169
  %1211 = vmatpush.msra.mxu0 %v1163
  %1212 = vmatpush.msra.mxu0 %v1157
  %1213 = vmatpush.msra.mxu0 %v1151
  %1214 = vmatpush.msra.mxu0 %v1145
  %1215 = vmatpush.msra.mxu0 %v1139
  %1216 = vmatpush.msra.mxu0 %v1133
  %1217 = vmatpush.msra.mxu0 %v1127
  %1218 = vmatpush.msra.mxu0 %v1121
  %1219 = vmatmul.f32.gmra.mxu0 %v1181
  %v1220 = vpop.f32.mrf.mxu0
  %v1221 = vadd.f32 %v1178, %v1220
  %1222 = vdwg.mxu0
  %1223 = vmatpush.msra.mxu0 0.0
  %1224 = vmatpush.msra.mxu0 0.0
  %1225 = vmatpush.msra.mxu0 0.0
  %1226 = vmatpush.msra.mxu0 0.0
  %1227 = vmatpush.msra.mxu0 0.0
  %1228 = vmatpush.msra.mxu0 0.0
  %1229 = vmatpush.msra.mxu0 0.0
  %1230 = vmatpush.msra.mxu0 %v1170
  %1231 = vmatpush.msra.mxu0 %v1164
  %1232 = vmatpush.msra.mxu0 %v1158
  %1233 = vmatpush.msra.mxu0 %v1152
  %1234 = vmatpush.msra.mxu0 %v1146
  %1235 = vmatpush.msra.mxu0 %v1140
  %1236 = vmatpush.msra.mxu0 %v1134
  %1237 = vmatpush.msra.mxu0 %v1128
  %1238 = vmatpush.msra.mxu0 %v1122
  %1239 = vmatmul.f32.gmra.mxu0 %v1181
  %v1240 = vpop.f32.mrf.mxu0
  %v1241 = vadd.f32 %v1178, %v1240
  %1242 = vdwg.mxu0
  %1243 = vmatpush.msra.mxu0 0.0
  %1244 = vmatpush.msra.mxu0 0.0
  %1245 = vmatpush.msra.mxu0 0.0
  %1246 = vmatpush.msra.mxu0 0.0
  %1247 = vmatpush.msra.mxu0 0.0
  %1248 = vmatpush.msra.mxu0 0.0
  %1249 = vmatpush.msra.mxu0 0.0
  %1250 = vmatpush.msra.mxu0 %v1171
  %1251 = vmatpush.msra.mxu0 %v1165
  %1252 = vmatpush.msra.mxu0 %v1159
  %1253 = vmatpush.msra.mxu0 %v1153
  %1254 = vmatpush.msra.mxu0 %v1147
  %1255 = vmatpush.msra.mxu0 %v1141
  %1256 = vmatpush.msra.mxu0 %v1135
  %1257 = vmatpush.msra.mxu0 %v1129
  %1258 = vmatpush.msra.mxu0 %v1123
  %1259 = vmatmul.f32.gmra.mxu0 %v1181
  %v1260 = vpop.f32.mrf.mxu0
  %v1261 = vadd.f32 %v1178, %v1260
  %1262 = vdwg.mxu0
  %1263 = vmatpush.msra.mxu0 0.0
  %1264 = vmatpush.msra.mxu0 0.0
  %1265 = vmatpush.msra.mxu0 0.0
  %1266 = vmatpush.msra.mxu0 0.0
  %1267 = vmatpush.msra.mxu0 0.0
  %1268 = vmatpush.msra.mxu0 0.0
  %1269 = vmatpush.msra.mxu0 0.0
  %1270 = vmatpush.msra.mxu0 %v1172
  %1271 = vmatpush.msra.mxu0 %v1166
  %1272 = vmatpush.msra.mxu0 %v1160
  %1273 = vmatpush.msra.mxu0 %v1154
  %1274 = vmatpush.msra.mxu0 %v1148
  %1275 = vmatpush.msra.mxu0 %v1142
  %1276 = vmatpush.msra.mxu0 %v1136
  %1277 = vmatpush.msra.mxu0 %v1130
  %1278 = vmatpush.msra.mxu0 %v1124
  %1279 = vmatmul.f32.gmra.mxu0 %v1181
  %v1280 = vpop.f32.mrf.mxu0
  %v1281 = vadd.f32 %v1178, %v1280
  %1282 = vdwg.mxu0
  %1283 = vmatpush.msra.mxu0 0.0
  %1284 = vmatpush.msra.mxu0 0.0
  %1285 = vmatpush.msra.mxu0 0.0
  %1286 = vmatpush.msra.mxu0 0.0
  %1287 = vmatpush.msra.mxu0 0.0
  %1288 = vmatpush.msra.mxu0 0.0
  %1289 = vmatpush.msra.mxu0 0.0
  %1290 = vmatpush.msra.mxu0 %v1173
  %1291 = vmatpush.msra.mxu0 %v1167
  %1292 = vmatpush.msra.mxu0 %v1161
  %1293 = vmatpush.msra.mxu0 %v1155
  %1294 = vmatpush.msra.mxu0 %v1149
  %1295 = vmatpush.msra.mxu0 %v1143
  %1296 = vmatpush.msra.mxu0 %v1137
  %1297 = vmatpush.msra.mxu0 %v1131
  %1298 = vmatpush.msra.mxu0 %v1125
  %1299 = vmatmul.f32.gmra.mxu0 %v1181
  %v1300 = vpop.f32.mrf.mxu0
  %v1301 = vadd.f32 %v1178, %v1300
  %1302 = vdwg.mxu0
  %v1303 = vld [vmem:[%s6] ss:$2 sm:$0x3f]
  %v1305 = vperm.slane %v1303, 0
  %v1306 = vperm.slane %v1303, 1
  %v1307 = vperm.slane %v1303, 2
  %v1308 = vperm.slane %v1303, 3
  %v1309 = vperm.slane %v1303, 4
  %v1310 = vperm.slane %v1303, 5
  %v1317 = vmul.f32 %v1201, %v1305
  %v1318 = vmul.f32 %v1221, %v1306
  %v1319 = vmul.f32 %v1241, %v1307
  %v1320 = vmul.f32 %v1261, %v1308
  %v1321 = vmul.f32 %v1281, %v1309
  %v1322 = vmul.f32 %v1301, %v1310
  %v1323 = vadd.f32 %v1317, %v1318
  %v1324 = vadd.f32 %v1323, %v1319
  %v1325 = vadd.f32 %v1324, %v1320
  %v1326 = vadd.f32 %v1325, %v1321
  %v1327 = vadd.f32 %v1326, %v1322
  %1328 = vadd.xlane.f32.xlu0 %v1327
  %v1329 = vpop.xlane.xlu0 %1328
  %v1330 = vmul.f32 %v1329, 0.00390625
  %v1331 = vmul.f32 %v1305, %v1330
  %v1332 = vmul.f32 %v1306, %v1330
  %v1333 = vmul.f32 %v1307, %v1330
  %v1334 = vmul.f32 %v1308, %v1330
  %v1335 = vmul.f32 %v1309, %v1330
  %v1336 = vmul.f32 %v1310, %v1330
  %v1337 = vadd.f32 %v1331, 0.0
  %v1338 = vadd.f32 %v1332, 0.0
  %v1339 = vadd.f32 %v1333, 0.0
  %v1340 = vadd.f32 %v1334, 0.0
  %v1341 = vadd.f32 %v1335, 0.0
  %v1342 = vadd.f32 %v1336, 0.0
  %v1343 = vld [vmem:[%s465] ss:$2 sm:$0x3f]
  %v1345 = vperm.slane %v1343, 0
  %v1346 = vperm.slane %v1343, 1
  %v1347 = vperm.slane %v1343, 2
  %v1348 = vperm.slane %v1343, 3
  %v1349 = vperm.slane %v1343, 4
  %v1350 = vperm.slane %v1343, 5
  %v1357 = vmul.f32 %v1201, %v1345
  %v1358 = vmul.f32 %v1221, %v1346
  %v1359 = vmul.f32 %v1241, %v1347
  %v1360 = vmul.f32 %v1261, %v1348
  %v1361 = vmul.f32 %v1281, %v1349
  %v1362 = vmul.f32 %v1301, %v1350
  %v1363 = vadd.f32 %v1357, %v1358
  %v1364 = vadd.f32 %v1363, %v1359
  %v1365 = vadd.f32 %v1364, %v1360
  %v1366 = vadd.f32 %v1365, %v1361
  %v1367 = vadd.f32 %v1366, %v1362
  %1368 = vadd.xlane.f32.xlu0 %v1367
  %v1369 = vpop.xlane.xlu0 %1368
  %v1370 = vmul.f32 %v1369, 0.00390625
  %v1371 = vmul.f32 %v1345, %v1370
  %v1372 = vmul.f32 %v1346, %v1370
  %v1373 = vmul.f32 %v1347, %v1370
  %v1374 = vmul.f32 %v1348, %v1370
  %v1375 = vmul.f32 %v1349, %v1370
  %v1376 = vmul.f32 %v1350, %v1370
  %v1377 = vadd.f32 %v1337, %v1371
  %v1378 = vadd.f32 %v1338, %v1372
  %v1379 = vadd.f32 %v1339, %v1373
  %v1380 = vadd.f32 %v1340, %v1374
  %v1381 = vadd.f32 %v1341, %v1375
  %v1382 = vadd.f32 %v1342, %v1376
  %v1383 = vsub.f32 %v1201, %v1377
  %v1384 = vsub.f32 %v1221, %v1378
  %v1385 = vsub.f32 %v1241, %v1379
  %v1386 = vsub.f32 %v1261, %v1380
  %v1387 = vsub.f32 %v1281, %v1381
  %v1388 = vsub.f32 %v1301, %v1382
  %v1389 = vmul.f32 %v1383, %v1383
  %v1390 = vmul.f32 %v1384, %v1384
  %v1391 = vmul.f32 %v1385, %v1385
  %v1392 = vmul.f32 %v1386, %v1386
  %v1393 = vmul.f32 %v1387, %v1387
  %v1394 = vmul.f32 %v1388, %v1388
  %v1395 = vmul.f32 %v1389, %v1305
  %v1396 = vmul.f32 %v1390, %v1306
  %v1397 = vmul.f32 %v1391, %v1307
  %v1398 = vmul.f32 %v1392, %v1308
  %v1399 = vmul.f32 %v1393, %v1309
  %v1400 = vmul.f32 %v1394, %v1310
  %v1401 = vadd.f32 %v1395, %v1396
  %v1402 = vadd.f32 %v1401, %v1397
  %v1403 = vadd.f32 %v1402, %v1398
  %v1404 = vadd.f32 %v1403, %v1399
  %v1405 = vadd.f32 %v1404, %v1400
  %1406 = vadd.xlane.f32.xlu0 %v1405
  %v1407 = vpop.xlane.xlu0 %1406
  %v1408 = vmul.f32 %v1407, 0.00390625
  %v1409 = vmul.f32 %v1305, %v1408
  %v1410 = vmul.f32 %v1306, %v1408
  %v1411 = vmul.f32 %v1307, %v1408
  %v1412 = vmul.f32 %v1308, %v1408
  %v1413 = vmul.f32 %v1309, %v1408
  %v1414 = vmul.f32 %v1310, %v1408
  %v1415 = vadd.f32 %v1409, 0.0
  %v1416 = vadd.f32 %v1410, 0.0
  %v1417 = vadd.f32 %v1411, 0.0
  %v1418 = vadd.f32 %v1412, 0.0
  %v1419 = vadd.f32 %v1413, 0.0
  %v1420 = vadd.f32 %v1414, 0.0
  %v1421 = vmul.f32 %v1389, %v1345
  %v1422 = vmul.f32 %v1390, %v1346
  %v1423 = vmul.f32 %v1391, %v1347
  %v1424 = vmul.f32 %v1392, %v1348
  %v1425 = vmul.f32 %v1393, %v1349
  %v1426 = vmul.f32 %v1394, %v1350
  %v1427 = vadd.f32 %v1421, %v1422
  %v1428 = vadd.f32 %v1427, %v1423
  %v1429 = vadd.f32 %v1428, %v1424
  %v1430 = vadd.f32 %v1429, %v1425
  %v1431 = vadd.f32 %v1430, %v1426
  %1432 = vadd.xlane.f32.xlu0 %v1431
  %v1433 = vpop.xlane.xlu0 %1432
  %v1434 = vmul.f32 %v1433, 0.00390625
  %v1435 = vmul.f32 %v1345, %v1434
  %v1436 = vmul.f32 %v1346, %v1434
  %v1437 = vmul.f32 %v1347, %v1434
  %v1438 = vmul.f32 %v1348, %v1434
  %v1439 = vmul.f32 %v1349, %v1434
  %v1440 = vmul.f32 %v1350, %v1434
  %v1441 = vadd.f32 %v1415, %v1435
  %v1442 = vadd.f32 %v1416, %v1436
  %v1443 = vadd.f32 %v1417, %v1437
  %v1444 = vadd.f32 %v1418, %v1438
  %v1445 = vadd.f32 %v1419, %v1439
  %v1446 = vadd.f32 %v1420, %v1440
  %v1447 = vadd.f32 %v1441, 1e-05
  %v1448 = vadd.f32 %v1442, 1e-05
  %v1449 = vadd.f32 %v1443, 1e-05
  %v1450 = vadd.f32 %v1444, 1e-05
  %v1451 = vadd.f32 %v1445, 1e-05
  %v1452 = vadd.f32 %v1446, 1e-05
  %v1453 = vrsqrt.pop %v1447
  %v1454 = vmul.f32 %v1453, %v1447
  %v1455 = vmul.f32 %v1454, %v1453
  %v1456 = vmul.f32 0.5, %v1455
  %v1457 = vsub.f32 1.5, %v1456
  %v1458 = vmul.f32 %v1453, %v1457
  %vm1459 = vweird.f32 %v1447
  %vm1460 = vweird.f32 %v1453
  %vm1461 = vmor %vm1459, %vm1460
  %v1462 = vsel %vm1461, %v1453, %v1458
  %v1463 = vrsqrt.pop %v1448
  %v1464 = vmul.f32 %v1463, %v1448
  %v1465 = vmul.f32 %v1464, %v1463
  %v1466 = vmul.f32 0.5, %v1465
  %v1467 = vsub.f32 1.5, %v1466
  %v1468 = vmul.f32 %v1463, %v1467
  %vm1469 = vweird.f32 %v1448
  %vm1470 = vweird.f32 %v1463
  %vm1471 = vmor %vm1469, %vm1470
  %v1472 = vsel %vm1471, %v1463, %v1468
  %v1473 = vrsqrt.pop %v1449
  %v1474 = vmul.f32 %v1473, %v1449
  %v1475 = vmul.f32 %v1474, %v1473
  %v1476 = vmul.f32 0.5, %v1475
  %v1477 = vsub.f32 1.5, %v1476
  %v1478 = vmul.f32 %v1473, %v1477
  %vm1479 = vweird.f32 %v1449
  %vm1480 = vweird.f32 %v1473
  %vm1481 = vmor %vm1479, %vm1480
  %v1482 = vsel %vm1481, %v1473, %v1478
  %v1483 = vrsqrt.pop %v1450
  %v1484 = vmul.f32 %v1483, %v1450
  %v1485 = vmul.f32 %v1484, %v1483
  %v1486 = vmul.f32 0.5, %v1485
  %v1487 = vsub.f32 1.5, %v1486
  %v1488 = vmul.f32 %v1483, %v1487
  %vm1489 = vweird.f32 %v1450
  %vm1490 = vweird.f32 %v1483
  %vm1491 = vmor %vm1489, %vm1490
  %v1492 = vsel %vm1491, %v1483, %v1488
  %v1493 = vrsqrt.pop %v1451
  %v1494 = vmul.f32 %v1493, %v1451
  %v1495 = vmul.f32 %v1494, %v1493
  %v1496 = vmul.f32 0.5, %v1495
  %v1497 = vsub.f32 1.5, %v1496
  %v1498 = vmul.f32 %v1493, %v1497
  %vm1499 = vweird.f32 %v1451
  %vm1500 = vweird.f32 %v1493
  %vm1501 = vmor %vm1499, %vm1500
  %v1502 = vsel %vm1501, %v1493, %v1498
  %v1503 = vrsqrt.pop %v1452
  %v1504 = vmul.f32 %v1503, %v1452
  %v1505 = vmul.f32 %v1504, %v1503
  %v1506 = vmul.f32 0.5, %v1505
  %v1507 = vsub.f32 1.5, %v1506
  %v1508 = vmul.f32 %v1503, %v1507
  %vm1509 = vweird.f32 %v1452
  %vm1510 = vweird.f32 %v1503
  %vm1511 = vmor %vm1509, %vm1510
  %v1512 = vsel %vm1511, %v1503, %v1508
  %v1513 = vmul.f32 %v1383, %v1462
  %v1514 = vmul.f32 %v1384, %v1472
  %v1515 = vmul.f32 %v1385, %v1482
  %v1516 = vmul.f32 %v1386, %v1492
  %v1517 = vmul.f32 %v1387, %v1502
  %v1518 = vmul.f32 %v1388, %v1512
  %v1519 = vadd.f32 %v132, %v1513
  %v1520 = vadd.f32 %v131, %v1514
  %v1521 = vadd.f32 %v130, %v1515
  %v1522 = vadd.f32 %v129, %v1516
  %v1523 = vadd.f32 %v128, %v1517
  %v1524 = vadd.f32 %v133, %v1518
  %1525 = vst [vmem:[%s7] sm:$0xff] %v1519
  %1526 = vst [vmem:[%s7 + $0x8] sm:$0xff] %v1520
  %1527 = vst [vmem:[%s7 + $0x10] sm:$0xff] %v1521
  %1528 = vst [vmem:[%s7 + $0x18] sm:$0xff] %v1522
  %1529 = vst [vmem:[%s7 + $0x20] sm:$0xff] %v1523
  %1530 = vst [vmem:[%s7 + $0x28] sm:$0xff] %v1524
  // Predicated region
  $region30: #{resnet_block_forward.1} parent=0 // pred_check
    _
  $region31: #{resnet_block_forward.1} parent=0 // pred_check_branch
    %1532 = sbr.rel (0) target = $region33
  $region32: #{resnet_block_forward.1} parent=0 // pred_region
    _
  $region33: #{resnet_block_forward.1} parent=0 // pred_fallthru
    _
  // Predicated region
  $region34: #{resnet_block_forward.1} parent=0 // pred_check
    _
  $region35: #{resnet_block_forward.1} parent=0 // pred_check_branch
    %1534 = sbr.rel (0) target = $region37
  $region36: #{resnet_block_forward.1} parent=0 // pred_region
    _
  $region37: #{resnet_block_forward.1} parent=0 // pred_fallthru
    _

</llo_original>
